<compile_context>
chip_gen: v7x
topology: tpu7x:2x2x1
jax: 0.10.0
libtpu: 0.0.40
codegen_flags: <defaults>
</compile_context>

<pallas_src>
import functools
import math

import jax
import jax.numpy as jnp
from jax import lax
from jax.experimental import pallas as pl
from jax.experimental.pallas import tpu as pltpu


def mha_kernel(xq_ref, xk_ref, xv_ref,
               wq_ref, bq_ref, wk_ref, bk_ref, wv_ref, bv_ref,
               wo_ref, bo_ref, o_ref, *, h, d_k):
    """One (batch, query-tile) block per grid step; all tiles live in VMEM."""
    xq = xq_ref[0]          # (TQ, D)  queries for this tile
    xk = xk_ref[0]          # (S,  D)  full keys
    xv = xv_ref[0]          # (S,  D)  full values

    mm_dtype = xq.dtype     # MXU input dtype (bf16 if the wrapper casts)

    # --- input projections: full-K (.,D)@(D,D) MXU matmuls, f32 accumulate.
    # The attention scale 1/sqrt(d_k) is already folded into wq/bq.
    q = (jnp.dot(xq, wq_ref[...], preferred_element_type=jnp.float32)
         + bq_ref[...]).astype(mm_dtype)
    k = (jnp.dot(xk, wk_ref[...], preferred_element_type=jnp.float32)
         + bk_ref[...]).astype(mm_dtype)
    v = (jnp.dot(xv, wv_ref[...], preferred_element_type=jnp.float32)
         + bv_ref[...]).astype(mm_dtype)

    tq = q.shape[0]
    s = k.shape[0]

    # --- split heads: (T, h*d_k) -> (h, T, d_k); all heads batched on the MXU.
    qh = q.reshape(tq, h, d_k).transpose(1, 0, 2)   # (h, TQ, d_k)
    kh = k.reshape(s, h, d_k).transpose(1, 0, 2)    # (h, S,  d_k)
    vh = v.reshape(s, h, d_k).transpose(1, 0, 2)    # (h, S,  d_k)

    # scores: contract d_k, batch over h -> (h, TQ, S) in f32 (no explicit .T).
    score = lax.dot_general(qh, kh, (((2,), (2,)), ((0,), (0,))),
                            preferred_element_type=jnp.float32)

    # numerically-stable softmax over keys (f32); reciprocal goes to the EUP.
    score = score - jnp.max(score, axis=-1, keepdims=True)
    e = jnp.exp(score)
    p = e * pl.reciprocal(jnp.sum(e, axis=-1, keepdims=True), approx=True)

    # attn = p @ v, batched over h -> (h, TQ, d_k).
    attn = lax.dot_general(p.astype(mm_dtype), vh, (((2,), (1,)), ((0,), (0,))),
                           preferred_element_type=jnp.float32)

    # concat heads -> (TQ, D) and do ONE full-K output projection.
    attn = attn.transpose(1, 0, 2).reshape(tq, h * d_k).astype(mm_dtype)
    out = jnp.dot(attn, wo_ref[...], preferred_element_type=jnp.float32) + bo_ref[...]
    o_ref[0] = out.astype(o_ref.dtype)


def multiheaded_attention(xq, xk, xv, params, h, *, q_tile=None, compute_dtype=None):
    B, S, D = xq.shape
    assert D % h == 0
    d_k = D // h
    wq, bq, wk, bk, wv, bv, wo, bo = params   # biases shaped (1, D)

    # Fold 1/sqrt(d_k) into the Q projection (saves an S*S VPU multiply/head).
    scale = 1.0 / math.sqrt(d_k)
    wq = wq * scale
    bq = bq * scale

    # Optional mixed precision: cast MXU inputs (e.g. jnp.bfloat16 on v6e/v7x).
    if compute_dtype is not None:
        cast = lambda a: a.astype(compute_dtype)
        xq, xk, xv = cast(xq), cast(xk), cast(xv)
        wq, bq, wk, bk, wv, bv, wo, bo = map(
            cast, (wq, bq, wk, bk, wv, bv, wo, bo))

    # Query tile: prefer 256-aligned (v6e/v7x MXU) then 128 (v5e), else full S.
    if q_tile is None:
        if S % 256 == 0:
            q_tile = 256
        elif S % 128 == 0:
            q_tile = 128
        else:
            q_tile = S
    assert S % q_tile == 0
    n_q = S // q_tile

    kernel = functools.partial(mha_kernel, h=h, d_k=d_k)

    q_spec = pl.BlockSpec((1, q_tile, D), lambda b, qi: (b, qi, 0))
    kv_spec = pl.BlockSpec((1, S, D), lambda b, qi: (b, 0, 0))
    # NOTE: on v7x (64 MiB VMEM) these constant-index weight specs could also
    # be single-buffered to halve weight VMEM; kept default-buffered here.
    w_spec = pl.BlockSpec((D, D), lambda b, qi: (0, 0))
    b_spec = pl.BlockSpec((1, D), lambda b, qi: (0, 0))

    return pl.pallas_call(
        kernel,
        out_shape=jax.ShapeDtypeStruct((B, S, D), xq.dtype),
        grid_spec=pltpu.PrefetchScalarGridSpec(
            num_scalar_prefetch=0,
            grid=(B, n_q),
            in_specs=[q_spec, kv_spec, kv_spec,
                      w_spec, b_spec, w_spec, b_spec, w_spec, b_spec,
                      w_spec, b_spec],
            out_specs=q_spec,
        ),
        compiler_params=pltpu.CompilerParams(
            dimension_semantics=("parallel", "parallel"),
            vmem_limit_bytes=48 * 1024 * 1024,
        ),
    )(xq, xk, xv, wq, bq, wk, bk, wv, bv, wo, bo)


def reference(xq, xk, xv, params, h):
    """Pure-JAX replica of the PyTorch forward (mask=None, dropout=eval)."""
    wq, bq, wk, bk, wv, bv, wo, bo = params
    B, S, D = xq.shape
    d_k = D // h
    q = (xq @ wq + bq).reshape(B, S, h, d_k).transpose(0, 2, 1, 3)
    k = (xk @ wk + bk).reshape(B, S, h, d_k).transpose(0, 2, 1, 3)
    v = (xv @ wv + bv).reshape(B, S, h, d_k).transpose(0, 2, 1, 3)
    score = jnp.einsum("bhqd,bhkd->bhqk", q, k) / math.sqrt(d_k)
    p = jax.nn.softmax(score, axis=-1)
    attn = jnp.einsum("bhqk,bhkd->bhqd", p, v)
    attn = attn.transpose(0, 2, 1, 3).reshape(B, S, D)
    return attn @ wo + bo


def init_params(key, model_dim):
    """Deterministic nn.Linear-style init: U(-1/sqrt(D), 1/sqrt(D))."""
    bound = 1.0 / math.sqrt(model_dim)
    keys = jax.random.split(key, 8)
    def lin(kw, kb):
        w = jax.random.uniform(kw, (model_dim, model_dim), jnp.float32, -bound, bound)
        b = jax.random.uniform(kb, (1, model_dim), jnp.float32, -bound, bound)
        return w, b
    wq, bq = lin(keys[0], keys[1])
    wk, bk = lin(keys[2], keys[3])
    wv, bv = lin(keys[4], keys[5])
    wo, bo = lin(keys[6], keys[7])
    return (wq, bq, wk, bk, wv, bv, wo, bo)


if __name__ == "__main__":
    B, S, D, H = 2, 8, 32, 4

    key = jax.random.PRNGKey(0)
    kq, kk, kv, kp = jax.random.split(key, 4)
    xq = jax.random.normal(kq, (B, S, D), jnp.float32)
    xk = jax.random.normal(kk, (B, S, D), jnp.float32)
    xv = jax.random.normal(kv, (B, S, D), jnp.float32)
    params = init_params(kp, D)

    out = multiheaded_attention(xq, xk, xv, params, H)
    out = jax.block_until_ready(out)

    ref = reference(xq, xk, xv, params, H)
    assert out.shape == (B, S, D)
    # Tolerance accounts for the EUP approximate reciprocal in the softmax.
    assert jnp.allclose(out, ref, atol=5e-3, rtol=5e-3), \
        float(jnp.max(jnp.abs(out - ref)))

    print("KERNEL_OK")
</pallas_src>

<mosaic_0001>
module attributes {stable_mosaic.version = 11 : i64} {
  func.func @mha_kernel(%arg0: i32, %arg1: i32, %arg2: memref<1x8x32xf32, #tpu.memory_space<vmem>>, %arg3: memref<1x8x32xf32, #tpu.memory_space<vmem>>, %arg4: memref<1x8x32xf32, #tpu.memory_space<vmem>>, %arg5: memref<32x32xf32, #tpu.memory_space<vmem>>, %arg6: memref<1x32xf32, #tpu.memory_space<vmem>>, %arg7: memref<32x32xf32, #tpu.memory_space<vmem>>, %arg8: memref<1x32xf32, #tpu.memory_space<vmem>>, %arg9: memref<32x32xf32, #tpu.memory_space<vmem>>, %arg10: memref<1x32xf32, #tpu.memory_space<vmem>>, %arg11: memref<32x32xf32, #tpu.memory_space<vmem>>, %arg12: memref<1x32xf32, #tpu.memory_space<vmem>>, %arg13: memref<1x8x32xf32, #tpu.memory_space<vmem>>) attributes {dimension_semantics = [#tpu.dimension_semantics<parallel>, #tpu.dimension_semantics<parallel>], iteration_bounds = array<i64: 2, 1>, scalar_prefetch = 0 : i64, scratch_operands = 0 : i64, tpu.core_type = #tpu.core_type<tc>, window_params = [{transform_indices = @transform_0, window_bounds = array<i64: 1, 8, 32>}, {transform_indices = @transform_1, window_bounds = array<i64: 1, 8, 32>}, {transform_indices = @transform_2, window_bounds = array<i64: 1, 8, 32>}, {pipeline_mode = #tpu.pipeline_mode<synchronous>, transform_indices = @transform_3, window_bounds = array<i64: 32, 32>}, {pipeline_mode = #tpu.pipeline_mode<synchronous>, transform_indices = @transform_4, window_bounds = array<i64: 1, 32>}, {pipeline_mode = #tpu.pipeline_mode<synchronous>, transform_indices = @transform_5, window_bounds = array<i64: 32, 32>}, {pipeline_mode = #tpu.pipeline_mode<synchronous>, transform_indices = @transform_6, window_bounds = array<i64: 1, 32>}, {pipeline_mode = #tpu.pipeline_mode<synchronous>, transform_indices = @transform_7, window_bounds = array<i64: 32, 32>}, {pipeline_mode = #tpu.pipeline_mode<synchronous>, transform_indices = @transform_8, window_bounds = array<i64: 1, 32>}, {pipeline_mode = #tpu.pipeline_mode<synchronous>, transform_indices = @transform_9, window_bounds = array<i64: 32, 32>}, {pipeline_mode = #tpu.pipeline_mode<synchronous>, transform_indices = @transform_10, window_bounds = array<i64: 1, 32>}, {transform_indices = @transform_11, window_bounds = array<i64: 1, 8, 32>}]} {
    %c0 = arith.constant 0 : index
    %c0_0 = arith.constant 0 : index
    %c0_1 = arith.constant 0 : index
    %0 = vector.load %arg2[%c0, %c0_0, %c0_1] : memref<1x8x32xf32, #tpu.memory_space<vmem>>, vector<1x8x32xf32>
    %1 = vector.shape_cast %0 : vector<1x8x32xf32> to vector<8x32xf32>
    %c0_2 = arith.constant 0 : index
    %c0_3 = arith.constant 0 : index
    %c0_4 = arith.constant 0 : index
    %2 = vector.load %arg3[%c0_2, %c0_3, %c0_4] : memref<1x8x32xf32, #tpu.memory_space<vmem>>, vector<1x8x32xf32>
    %3 = vector.shape_cast %2 : vector<1x8x32xf32> to vector<8x32xf32>
    %c0_5 = arith.constant 0 : index
    %c0_6 = arith.constant 0 : index
    %c0_7 = arith.constant 0 : index
    %4 = vector.load %arg4[%c0_5, %c0_6, %c0_7] : memref<1x8x32xf32, #tpu.memory_space<vmem>>, vector<1x8x32xf32>
    %5 = vector.shape_cast %4 : vector<1x8x32xf32> to vector<8x32xf32>
    %c0_8 = arith.constant 0 : index
    %c0_9 = arith.constant 0 : index
    %6 = vector.load %arg5[%c0_8, %c0_9] : memref<32x32xf32, #tpu.memory_space<vmem>>, vector<32x32xf32>
    %cst = arith.constant dense<0.000000e+00> : vector<8x32xf32>
    %7 = tpu.matmul %1, %6, %cst {dimension_numbers = #tpu.dot_dimension_numbers<[1], [0], [0], [1], [0, 0, 1, 1], [], []>} : vector<8x32xf32>, vector<32x32xf32>, vector<8x32xf32> -> vector<8x32xf32>
    %c0_10 = arith.constant 0 : index
    %c0_11 = arith.constant 0 : index
    %8 = vector.load %arg6[%c0_10, %c0_11] : memref<1x32xf32, #tpu.memory_space<vmem>>, vector<1x32xf32>
    %9 = vector.broadcast %8 : vector<1x32xf32> to vector<8x32xf32>
    %10 = arith.addf %7, %9 : vector<8x32xf32>
    %c0_12 = arith.constant 0 : index
    %c0_13 = arith.constant 0 : index
    %11 = vector.load %arg7[%c0_12, %c0_13] : memref<32x32xf32, #tpu.memory_space<vmem>>, vector<32x32xf32>
    %cst_14 = arith.constant dense<0.000000e+00> : vector<8x32xf32>
    %12 = tpu.matmul %3, %11, %cst_14 {dimension_numbers = #tpu.dot_dimension_numbers<[1], [0], [0], [1], [0, 0, 1, 1], [], []>} : vector<8x32xf32>, vector<32x32xf32>, vector<8x32xf32> -> vector<8x32xf32>
    %c0_15 = arith.constant 0 : index
    %c0_16 = arith.constant 0 : index
    %13 = vector.load %arg8[%c0_15, %c0_16] : memref<1x32xf32, #tpu.memory_space<vmem>>, vector<1x32xf32>
    %14 = vector.broadcast %13 : vector<1x32xf32> to vector<8x32xf32>
    %15 = arith.addf %12, %14 : vector<8x32xf32>
    %c0_17 = arith.constant 0 : index
    %c0_18 = arith.constant 0 : index
    %16 = vector.load %arg9[%c0_17, %c0_18] : memref<32x32xf32, #tpu.memory_space<vmem>>, vector<32x32xf32>
    %cst_19 = arith.constant dense<0.000000e+00> : vector<8x32xf32>
    %17 = tpu.matmul %5, %16, %cst_19 {dimension_numbers = #tpu.dot_dimension_numbers<[1], [0], [0], [1], [0, 0, 1, 1], [], []>} : vector<8x32xf32>, vector<32x32xf32>, vector<8x32xf32> -> vector<8x32xf32>
    %c0_20 = arith.constant 0 : index
    %c0_21 = arith.constant 0 : index
    %18 = vector.load %arg10[%c0_20, %c0_21] : memref<1x32xf32, #tpu.memory_space<vmem>>, vector<1x32xf32>
    %19 = vector.broadcast %18 : vector<1x32xf32> to vector<8x32xf32>
    %20 = arith.addf %17, %19 : vector<8x32xf32>
    %21 = vector.shape_cast %10 : vector<8x32xf32> to vector<8x4x8xf32>
    %22 = tpu.transpose %21, [1, 0, 2] : vector<8x4x8xf32> -> vector<4x8x8xf32>
    %23 = vector.shape_cast %15 : vector<8x32xf32> to vector<8x4x8xf32>
    %24 = tpu.transpose %23, [1, 0, 2] : vector<8x4x8xf32> -> vector<4x8x8xf32>
    %25 = vector.shape_cast %20 : vector<8x32xf32> to vector<8x4x8xf32>
    %26 = tpu.transpose %25, [1, 0, 2] : vector<8x4x8xf32> -> vector<4x8x8xf32>
    %cst_22 = arith.constant dense<0.000000e+00> : vector<4x8x8xf32>
    %27 = tpu.matmul %22, %24, %cst_22 {dimension_numbers = #tpu.dot_dimension_numbers<[2], [2], [1], [1], [0, 0, 0, 1, 1, 1], [0], [0]>} : vector<4x8x8xf32>, vector<4x8x8xf32>, vector<4x8x8xf32> -> vector<4x8x8xf32>
    %cst_23 = arith.constant dense<0xFF800000> : vector<4x8xf32>
    %28 = vector.multi_reduction <maximumf>, %27, %cst_23 [2] : vector<4x8x8xf32> to vector<4x8xf32>
    %29 = vector.shape_cast %28 : vector<4x8xf32> to vector<4x8x1xf32>
    %30 = vector.broadcast %29 : vector<4x8x1xf32> to vector<4x8x8xf32>
    %31 = arith.subf %27, %30 : vector<4x8x8xf32>
    %32 = math.exp %31 : vector<4x8x8xf32>
    %cst_24 = arith.constant dense<0.000000e+00> : vector<4x8xf32>
    %33 = vector.multi_reduction <add>, %32, %cst_24 [2] : vector<4x8x8xf32> to vector<4x8xf32>
    %34 = vector.shape_cast %33 : vector<4x8xf32> to vector<4x8x1xf32>
    %35 = tpu.reciprocal %34 {approx = true} : vector<4x8x1xf32> -> vector<4x8x1xf32>
    %36 = vector.broadcast %35 : vector<4x8x1xf32> to vector<4x8x8xf32>
    %37 = arith.mulf %32, %36 : vector<4x8x8xf32>
    %cst_25 = arith.constant dense<0.000000e+00> : vector<4x8x8xf32>
    %38 = tpu.matmul %37, %26, %cst_25 {dimension_numbers = #tpu.dot_dimension_numbers<[2], [1], [1], [2], [0, 0, 0, 1, 1, 2], [0], [0]>} : vector<4x8x8xf32>, vector<4x8x8xf32>, vector<4x8x8xf32> -> vector<4x8x8xf32>
    %39 = tpu.transpose %38, [1, 0, 2] : vector<4x8x8xf32> -> vector<8x4x8xf32>
    %40 = vector.shape_cast %39 : vector<8x4x8xf32> to vector<8x32xf32>
    %c0_26 = arith.constant 0 : index
    %c0_27 = arith.constant 0 : index
    %41 = vector.load %arg11[%c0_26, %c0_27] : memref<32x32xf32, #tpu.memory_space<vmem>>, vector<32x32xf32>
    %cst_28 = arith.constant dense<0.000000e+00> : vector<8x32xf32>
    %42 = tpu.matmul %40, %41, %cst_28 {dimension_numbers = #tpu.dot_dimension_numbers<[1], [0], [0], [1], [0, 0, 1, 1], [], []>} : vector<8x32xf32>, vector<32x32xf32>, vector<8x32xf32> -> vector<8x32xf32>
    %c0_29 = arith.constant 0 : index
    %c0_30 = arith.constant 0 : index
    %43 = vector.load %arg12[%c0_29, %c0_30] : memref<1x32xf32, #tpu.memory_space<vmem>>, vector<1x32xf32>
    %44 = vector.broadcast %43 : vector<1x32xf32> to vector<8x32xf32>
    %45 = arith.addf %42, %44 : vector<8x32xf32>
    %c0_31 = arith.constant 0 : index
    %c0_32 = arith.constant 0 : index
    %c0_33 = arith.constant 0 : index
    %46 = vector.load %arg13[%c0_31, %c0_32, %c0_33] : memref<1x8x32xf32, #tpu.memory_space<vmem>>, vector<1x8x32xf32>
    %47 = vector.shape_cast %46 : vector<1x8x32xf32> to vector<8x32xf32>
    %48 = vector.shape_cast %45 : vector<8x32xf32> to vector<1x8x32xf32>
    tpu.vector_store %arg13[%c0_31, %c0_32, %c0_33], %48 {strides = array<i32>} : memref<1x8x32xf32, #tpu.memory_space<vmem>>, vector<1x8x32xf32>,
    return
  }
  func.func @transform_0(%arg0: i32, %arg1: i32) -> (i32, i32, i32) {
    %c0_i32 = arith.constant 0 : i32
    %c0_i32_0 = arith.constant 0 : i32
    return %arg0, %arg1, %c0_i32 : i32, i32, i32
  }
  func.func @transform_1(%arg0: i32, %arg1: i32) -> (i32, i32, i32) {
    %c0_i32 = arith.constant 0 : i32
    %c0_i32_0 = arith.constant 0 : i32
    %c0_i32_1 = arith.constant 0 : i32
    return %arg0, %c0_i32, %c0_i32_0 : i32, i32, i32
  }
  func.func @transform_2(%arg0: i32, %arg1: i32) -> (i32, i32, i32) {
    %c0_i32 = arith.constant 0 : i32
    %c0_i32_0 = arith.constant 0 : i32
    %c0_i32_1 = arith.constant 0 : i32
    return %arg0, %c0_i32, %c0_i32_0 : i32, i32, i32
  }
  func.func @transform_3(%arg0: i32, %arg1: i32) -> (i32, i32) {
    %c0_i32 = arith.constant 0 : i32
    %c0_i32_0 = arith.constant 0 : i32
    %c0_i32_1 = arith.constant 0 : i32
    return %c0_i32, %c0_i32_0 : i32, i32
  }
  func.func @transform_4(%arg0: i32, %arg1: i32) -> (i32, i32) {
    %c0_i32 = arith.constant 0 : i32
    %c0_i32_0 = arith.constant 0 : i32
    %c0_i32_1 = arith.constant 0 : i32
    return %c0_i32, %c0_i32_0 : i32, i32
  }
  func.func @transform_5(%arg0: i32, %arg1: i32) -> (i32, i32) {
    %c0_i32 = arith.constant 0 : i32
    %c0_i32_0 = arith.constant 0 : i32
    %c0_i32_1 = arith.constant 0 : i32
    return %c0_i32, %c0_i32_0 : i32, i32
  }
  func.func @transform_6(%arg0: i32, %arg1: i32) -> (i32, i32) {
    %c0_i32 = arith.constant 0 : i32
    %c0_i32_0 = arith.constant 0 : i32
    %c0_i32_1 = arith.constant 0 : i32
    return %c0_i32, %c0_i32_0 : i32, i32
  }
  func.func @transform_7(%arg0: i32, %arg1: i32) -> (i32, i32) {
    %c0_i32 = arith.constant 0 : i32
    %c0_i32_0 = arith.constant 0 : i32
    %c0_i32_1 = arith.constant 0 : i32
    return %c0_i32, %c0_i32_0 : i32, i32
  }
  func.func @transform_8(%arg0: i32, %arg1: i32) -> (i32, i32) {
    %c0_i32 = arith.constant 0 : i32
    %c0_i32_0 = arith.constant 0 : i32
    %c0_i32_1 = arith.constant 0 : i32
    return %c0_i32, %c0_i32_0 : i32, i32
  }
  func.func @transform_9(%arg0: i32, %arg1: i32) -> (i32, i32) {
    %c0_i32 = arith.constant 0 : i32
    %c0_i32_0 = arith.constant 0 : i32
    %c0_i32_1 = arith.constant 0 : i32
    return %c0_i32, %c0_i32_0 : i32, i32
  }
  func.func @transform_10(%arg0: i32, %arg1: i32) -> (i32, i32) {
    %c0_i32 = arith.constant 0 : i32
    %c0_i32_0 = arith.constant 0 : i32
    %c0_i32_1 = arith.constant 0 : i32
    return %c0_i32, %c0_i32_0 : i32, i32
  }
  func.func @transform_11(%arg0: i32, %arg1: i32) -> (i32, i32, i32) {
    %c0_i32 = arith.constant 0 : i32
    %c0_i32_0 = arith.constant 0 : i32
    return %arg0, %arg1, %c0_i32 : i32, i32, i32
  }
}

</mosaic_0001>

<llo_original>
// kernel: tpu_custom_call.1
$region0: #{tpu_custom_call.1}
  #allocation0 [shape = 'u32[]', space=smem, size = 0x4, offset = 0x4, fixed_abs, tag = 'smem constant byte address 0x4 - core index']
  #allocation1 [shape = 'u32[144,128]{1,0:T(1,128)}', space=vmem, size = 0x12000, scoped, tag = 'internal scratch']
  %s0 = inlined_call_operand.hbm [shape: f32[2,8,32], index: 0, kind: input, shape index: {}]
  %s1 = inlined_call_operand.hbm [shape: f32[2,8,32], index: 1, kind: input, shape index: {}]
  %s2 = inlined_call_operand.hbm [shape: f32[2,8,32], index: 2, kind: input, shape index: {}]
  %s3 = inlined_call_operand.hbm [shape: f32[32,32], index: 3, kind: input, shape index: {}]
  %s4 = inlined_call_operand.vmem [shape: f32[1,32], index: 4, kind: input, shape index: {}]
  %s5 = inlined_call_operand.hbm [shape: f32[32,32], index: 5, kind: input, shape index: {}]
  %s6 = inlined_call_operand.vmem [shape: f32[1,32], index: 6, kind: input, shape index: {}]
  %s7 = inlined_call_operand.hbm [shape: f32[32,32], index: 7, kind: input, shape index: {}]
  %s8 = inlined_call_operand.hbm [shape: f32[1,32], index: 8, kind: input, shape index: {}]
  %s9 = inlined_call_operand.vmem [shape: f32[32,32], index: 9, kind: input, shape index: {}]
  %s10 = inlined_call_operand.vmem [shape: f32[1,32], index: 10, kind: input, shape index: {}]
  %s11 = inlined_call_operand.hbm [shape: f32[2,8,32], index: 11, kind: output, shape index: {}]
  %s12 = sld [smem:[#allocation0]]
  $region105: #{tpu_custom_call.1} parent=0
    _
  %s14 = ssub.s32 1, %s12
  %s15 = scalar_select 0, %s14, %s12
  $region1: #{tpu_custom_call.1} parent=0
    #allocation2 [shape = 'u8[8192]{0}', space=vmem, size = 0x2000, scoped, tag = 'input window, operand 0']
    #allocation3 [shape = 's32[2]{0}', space=sflag, size = 0x8, scoped, tag = 'scoped memory for tpu_custom_call.1']
    #allocation4 [shape = 's32[2]{0}', space=sflag, size = 0x8, scoped, tag = 'scoped memory for tpu_custom_call.1']
    #allocation5 [shape = 'u8[8192]{0}', space=vmem, size = 0x2000, scoped, tag = 'input window, operand 1']
    #allocation6 [shape = 's32[2]{0}', space=sflag, size = 0x8, scoped, tag = 'scoped memory for tpu_custom_call.1']
    #allocation7 [shape = 'u8[8192]{0}', space=vmem, size = 0x2000, scoped, tag = 'input window, operand 2']
    #allocation8 [shape = 'u8[16384]{0}', space=vmem, size = 0x4000, scoped, tag = 'input window, operand 3, single buffered']
    #allocation9 [shape = 's32[1]{0}', space=sflag, size = 0x4, scoped, tag = 'scoped memory for tpu_custom_call.1']
    #allocation10 [shape = 'u8[16384]{0}', space=vmem, size = 0x4000, scoped, tag = 'input window, operand 5, single buffered']
    #allocation11 [shape = 'u8[16384]{0}', space=vmem, size = 0x4000, scoped, tag = 'input window, operand 7, single buffered']
    #allocation12 [shape = 's32[1]{0}', space=sflag, size = 0x4, scoped, tag = 'scoped memory for tpu_custom_call.1']
    #allocation13 [shape = 'u8[512]{0}', space=vmem, size = 0x400, scoped, tag = 'input window, operand 8, single buffered']
    #allocation14 [shape = 'u8[8192]{0}', space=vmem, size = 0x2000, scoped, tag = 'output window, operand 0']
    %16 = vsyncpa [#allocation3], 0
    %s17 = scalar_lea.sflag [#allocation3], 1
    %18 = vsyncpa %s17, 0
    %19 = vsyncpa [#allocation6], 0
    %s20 = scalar_lea.sflag [#allocation6], 1
    %21 = vsyncpa %s20, 0
    %22 = vsyncpa [#allocation9], 0
    %23 = vsyncpa [#allocation12], 0
    %24 = vsyncpa [#allocation4], 0
    %s25 = scalar_lea.sflag [#allocation4], 1
    %26 = vsyncpa %s25, 0
    loop: start=0, step=1, limit=4
    $region2: #{tpu_custom_call.1} parent=1 // loop_pre_header
      _
    $region3: #{tpu_custom_call.1} parent=1 // loop_header
      %s28 = sphi 0, %s32
      %p29 = scmp.ge.s32.totalorder %s28, 4
      %s35 = sphi 0, %s47
      %s36 = sphi 0, %s43
      %s37 = sphi 0, %s35
      %s38 = sphi 0, %s36
      %s39 = sphi 0, %s37
      %s40 = sphi 0, %s38
      %s52 = sphi 0, %s54
      %s55 = sphi 0, %s52
      %s56 = sphi 0, %s55
      %s72 = sphi 0, %s56
      %s78 = sphi 0, %s80
      %s81 = sphi 0, %s78
      %s82 = sphi 0, %s81
      %s98 = sphi 0, %s82
      %s104 = sphi 0, %s106
      %s107 = sphi 0, %s104
      %s108 = sphi 0, %s107
      %s124 = sphi 0, %s108
      %s128 = sphi 0, %s128
      %s130 = sphi 0, %s128
      %s131 = sphi 0, %s130
      %s145 = sphi 0, %s131
      %s149 = sphi 0, %s149
      %s151 = sphi 0, %s149
      %s152 = sphi 0, %s151
      %s166 = sphi 0, %s152
      %s170 = sphi 0, %s170
      %s172 = sphi 0, %s170
      %s173 = sphi 0, %s172
      %s187 = sphi 0, %s173
      %s191 = sphi 0, %s191
      %s193 = sphi 0, %s191
      %s194 = sphi 0, %s193
      %s208 = sphi 0, %s194
      %s212 = sphi 0, %s212
      %s214 = sphi 0, %s212
      %s215 = sphi 0, %s214
      %s229 = sphi 0, %s215
      %s233 = sphi 0, %s233
      %s235 = sphi 0, %s233
      %s236 = sphi 0, %s235
      %s250 = sphi 0, %s236
      %s254 = sphi 0, %s254
      %s256 = sphi 0, %s254
      %s257 = sphi 0, %s256
      %s271 = sphi 0, %s257
      %s275 = sphi 0, %s275
      %s277 = sphi 0, %s275
      %s278 = sphi 0, %s277
      %s292 = sphi 0, %s278
      %s300 = sphi 0, %s302
      %s303 = sphi 0, %s300
      %s304 = sphi 0, %s303
      %s320 = sphi 0, %s304
    $region4: #{tpu_custom_call.1} parent=1 // loop_header_branch
      %31 = sbr.rel (%p29) target = $region8
    $region5: #{tpu_custom_call.1} parent=1 // loop_body
      %s33 = ssub.s32 %s28, 1
      %s34 = ssub.s32 %s28, 2
      %s41 = sadd.s32 1, %s36
      %p42 = scmp.ge.s32.totalorder %s41, 1
      %s43 = scalar_select %p42, 0, %s41
      %s44 = sadd.s32 1, %s35
      %s45 = scalar_select %p42, %s44, %s35
      %p46 = scmp.ge.s32.totalorder %s45, 2
      %s47 = scalar_select %p46, 0, %s45
      %s48 = ssub.s32 %s35, %s47
      %s49 = ssub.s32 %s36, %s43
      %s50 = sor.u32 %s48, %s49
      %p51 = scmp.eq.s32.totalorder %s50, 0
      %s53 = sadd.s32 %s52, 1
      %s54 = scalar_select %p51, %s52, %s53
      %p57 = pneg %p51
      %p58 = scmp.eq.s32.totalorder %s28, 1
      %p59 = por %p57, %p58
      %p60 = scmp.ne.s32.totalorder %s52, %s55
      %p61 = scmp.eq.s32.totalorder %s28, 0
      %p62 = por %p60, %p61
      %p63 = scmp.ne.s32.totalorder %s52, %s55
      %p64 = scmp.eq.s32.totalorder %s33, 1
      %p65 = por %p63, %p64
      %p66 = scmp.ne.s32.totalorder %s55, %s56
      %p67 = scmp.eq.s32.totalorder %s33, 0
      %p68 = por %p66, %p67
      %p69 = scmp.ne.s32.totalorder %s55, %s56
      %p70 = scmp.eq.s32.totalorder %s34, 1
      %p71 = por %p69, %p70
      %p73 = scmp.ne.s32.totalorder %s56, %s72
      %p74 = scmp.eq.s32.totalorder %s34, 0
      %p75 = por %p73, %p74
      %s76 = ssub.s32 %s35, %s47
      %p77 = scmp.eq.s32.totalorder %s76, 0
      %s79 = sadd.s32 %s78, 1
      %s80 = scalar_select %p77, %s78, %s79
      %p83 = pneg %p77
      %p84 = scmp.eq.s32.totalorder %s28, 1
      %p85 = por %p83, %p84
      %p86 = scmp.ne.s32.totalorder %s78, %s81
      %p87 = scmp.eq.s32.totalorder %s28, 0
      %p88 = por %p86, %p87
      %p89 = scmp.ne.s32.totalorder %s78, %s81
      %p90 = scmp.eq.s32.totalorder %s33, 1
      %p91 = por %p89, %p90
      %p92 = scmp.ne.s32.totalorder %s81, %s82
      %p93 = scmp.eq.s32.totalorder %s33, 0
      %p94 = por %p92, %p93
      %p95 = scmp.ne.s32.totalorder %s81, %s82
      %p96 = scmp.eq.s32.totalorder %s34, 1
      %p97 = por %p95, %p96
      %p99 = scmp.ne.s32.totalorder %s82, %s98
      %p100 = scmp.eq.s32.totalorder %s34, 0
      %p101 = por %p99, %p100
      %s102 = ssub.s32 %s35, %s47
      %p103 = scmp.eq.s32.totalorder %s102, 0
      %s105 = sadd.s32 %s104, 1
      %s106 = scalar_select %p103, %s104, %s105
      %p109 = pneg %p103
      %p110 = scmp.eq.s32.totalorder %s28, 1
      %p111 = por %p109, %p110
      %p112 = scmp.ne.s32.totalorder %s104, %s107
      %p113 = scmp.eq.s32.totalorder %s28, 0
      %p114 = por %p112, %p113
      %p115 = scmp.ne.s32.totalorder %s104, %s107
      %p116 = scmp.eq.s32.totalorder %s33, 1
      %p117 = por %p115, %p116
      %p118 = scmp.ne.s32.totalorder %s107, %s108
      %p119 = scmp.eq.s32.totalorder %s33, 0
      %p120 = por %p118, %p119
      %p121 = scmp.ne.s32.totalorder %s107, %s108
      %p122 = scmp.eq.s32.totalorder %s34, 1
      %p123 = por %p121, %p122
      %p125 = scmp.ne.s32.totalorder %s108, %s124
      %p126 = scmp.eq.s32.totalorder %s34, 0
      %p127 = por %p125, %p126
      %s129 = sadd.s32 %s128, 1
      %p132 = scmp.eq.s32.totalorder %s28, 1
      %p133 = scmp.ne.s32.totalorder %s128, %s130
      %p134 = scmp.eq.s32.totalorder %s28, 0
      %p135 = por %p133, %p134
      %p136 = scmp.ne.s32.totalorder %s128, %s130
      %p137 = scmp.eq.s32.totalorder %s33, 1
      %p138 = por %p136, %p137
      %p139 = scmp.ne.s32.totalorder %s130, %s131
      %p140 = scmp.eq.s32.totalorder %s33, 0
      %p141 = por %p139, %p140
      %p142 = scmp.ne.s32.totalorder %s130, %s131
      %p143 = scmp.eq.s32.totalorder %s34, 1
      %p144 = por %p142, %p143
      %p146 = scmp.ne.s32.totalorder %s131, %s145
      %p147 = scmp.eq.s32.totalorder %s34, 0
      %p148 = por %p146, %p147
      %s150 = sadd.s32 %s149, 1
      %p153 = scmp.eq.s32.totalorder %s28, 1
      %p154 = scmp.ne.s32.totalorder %s149, %s151
      %p155 = scmp.eq.s32.totalorder %s28, 0
      %p156 = por %p154, %p155
      %p157 = scmp.ne.s32.totalorder %s149, %s151
      %p158 = scmp.eq.s32.totalorder %s33, 1
      %p159 = por %p157, %p158
      %p160 = scmp.ne.s32.totalorder %s151, %s152
      %p161 = scmp.eq.s32.totalorder %s33, 0
      %p162 = por %p160, %p161
      %p163 = scmp.ne.s32.totalorder %s151, %s152
      %p164 = scmp.eq.s32.totalorder %s34, 1
      %p165 = por %p163, %p164
      %p167 = scmp.ne.s32.totalorder %s152, %s166
      %p168 = scmp.eq.s32.totalorder %s34, 0
      %p169 = por %p167, %p168
      %s171 = sadd.s32 %s170, 1
      %p174 = scmp.eq.s32.totalorder %s28, 1
      %p175 = scmp.ne.s32.totalorder %s170, %s172
      %p176 = scmp.eq.s32.totalorder %s28, 0
      %p177 = por %p175, %p176
      %p178 = scmp.ne.s32.totalorder %s170, %s172
      %p179 = scmp.eq.s32.totalorder %s33, 1
      %p180 = por %p178, %p179
      %p181 = scmp.ne.s32.totalorder %s172, %s173
      %p182 = scmp.eq.s32.totalorder %s33, 0
      %p183 = por %p181, %p182
      %p184 = scmp.ne.s32.totalorder %s172, %s173
      %p185 = scmp.eq.s32.totalorder %s34, 1
      %p186 = por %p184, %p185
      %p188 = scmp.ne.s32.totalorder %s173, %s187
      %p189 = scmp.eq.s32.totalorder %s34, 0
      %p190 = por %p188, %p189
      %s192 = sadd.s32 %s191, 1
      %p195 = scmp.eq.s32.totalorder %s28, 1
      %p196 = scmp.ne.s32.totalorder %s191, %s193
      %p197 = scmp.eq.s32.totalorder %s28, 0
      %p198 = por %p196, %p197
      %p199 = scmp.ne.s32.totalorder %s191, %s193
      %p200 = scmp.eq.s32.totalorder %s33, 1
      %p201 = por %p199, %p200
      %p202 = scmp.ne.s32.totalorder %s193, %s194
      %p203 = scmp.eq.s32.totalorder %s33, 0
      %p204 = por %p202, %p203
      %p205 = scmp.ne.s32.totalorder %s193, %s194
      %p206 = scmp.eq.s32.totalorder %s34, 1
      %p207 = por %p205, %p206
      %p209 = scmp.ne.s32.totalorder %s194, %s208
      %p210 = scmp.eq.s32.totalorder %s34, 0
      %p211 = por %p209, %p210
      %s213 = sadd.s32 %s212, 1
      %p216 = scmp.eq.s32.totalorder %s28, 1
      %p217 = scmp.ne.s32.totalorder %s212, %s214
      %p218 = scmp.eq.s32.totalorder %s28, 0
      %p219 = por %p217, %p218
      %p220 = scmp.ne.s32.totalorder %s212, %s214
      %p221 = scmp.eq.s32.totalorder %s33, 1
      %p222 = por %p220, %p221
      %p223 = scmp.ne.s32.totalorder %s214, %s215
      %p224 = scmp.eq.s32.totalorder %s33, 0
      %p225 = por %p223, %p224
      %p226 = scmp.ne.s32.totalorder %s214, %s215
      %p227 = scmp.eq.s32.totalorder %s34, 1
      %p228 = por %p226, %p227
      %p230 = scmp.ne.s32.totalorder %s215, %s229
      %p231 = scmp.eq.s32.totalorder %s34, 0
      %p232 = por %p230, %p231
      %s234 = sadd.s32 %s233, 1
      %p237 = scmp.eq.s32.totalorder %s28, 1
      %p238 = scmp.ne.s32.totalorder %s233, %s235
      %p239 = scmp.eq.s32.totalorder %s28, 0
      %p240 = por %p238, %p239
      %p241 = scmp.ne.s32.totalorder %s233, %s235
      %p242 = scmp.eq.s32.totalorder %s33, 1
      %p243 = por %p241, %p242
      %p244 = scmp.ne.s32.totalorder %s235, %s236
      %p245 = scmp.eq.s32.totalorder %s33, 0
      %p246 = por %p244, %p245
      %p247 = scmp.ne.s32.totalorder %s235, %s236
      %p248 = scmp.eq.s32.totalorder %s34, 1
      %p249 = por %p247, %p248
      %p251 = scmp.ne.s32.totalorder %s236, %s250
      %p252 = scmp.eq.s32.totalorder %s34, 0
      %p253 = por %p251, %p252
      %s255 = sadd.s32 %s254, 1
      %p258 = scmp.eq.s32.totalorder %s28, 1
      %p259 = scmp.ne.s32.totalorder %s254, %s256
      %p260 = scmp.eq.s32.totalorder %s28, 0
      %p261 = por %p259, %p260
      %p262 = scmp.ne.s32.totalorder %s254, %s256
      %p263 = scmp.eq.s32.totalorder %s33, 1
      %p264 = por %p262, %p263
      %p265 = scmp.ne.s32.totalorder %s256, %s257
      %p266 = scmp.eq.s32.totalorder %s33, 0
      %p267 = por %p265, %p266
      %p268 = scmp.ne.s32.totalorder %s256, %s257
      %p269 = scmp.eq.s32.totalorder %s34, 1
      %p270 = por %p268, %p269
      %p272 = scmp.ne.s32.totalorder %s257, %s271
      %p273 = scmp.eq.s32.totalorder %s34, 0
      %p274 = por %p272, %p273
      %s276 = sadd.s32 %s275, 1
      %p279 = scmp.eq.s32.totalorder %s28, 1
      %p280 = scmp.ne.s32.totalorder %s275, %s277
      %p281 = scmp.eq.s32.totalorder %s28, 0
      %p282 = por %p280, %p281
      %p283 = scmp.ne.s32.totalorder %s275, %s277
      %p284 = scmp.eq.s32.totalorder %s33, 1
      %p285 = por %p283, %p284
      %p286 = scmp.ne.s32.totalorder %s277, %s278
      %p287 = scmp.eq.s32.totalorder %s33, 0
      %p288 = por %p286, %p287
      %p289 = scmp.ne.s32.totalorder %s277, %s278
      %p290 = scmp.eq.s32.totalorder %s34, 1
      %p291 = por %p289, %p290
      %p293 = scmp.ne.s32.totalorder %s278, %s292
      %p294 = scmp.eq.s32.totalorder %s34, 0
      %p295 = por %p293, %p294
      %s296 = ssub.s32 %s35, %s47
      %s297 = ssub.s32 %s36, %s43
      %s298 = sor.u32 %s296, %s297
      %p299 = scmp.eq.s32.totalorder %s298, 0
      %s301 = sadd.s32 %s300, 1
      %s302 = scalar_select %p299, %s300, %s301
      %p305 = pneg %p299
      %p306 = scmp.eq.s32.totalorder %s28, 1
      %p307 = por %p305, %p306
      %p308 = scmp.ne.s32.totalorder %s300, %s303
      %p309 = scmp.eq.s32.totalorder %s28, 0
      %p310 = por %p308, %p309
      %p311 = scmp.ne.s32.totalorder %s300, %s303
      %p312 = scmp.eq.s32.totalorder %s33, 1
      %p313 = por %p311, %p312
      %p314 = scmp.ne.s32.totalorder %s303, %s304
      %p315 = scmp.eq.s32.totalorder %s33, 0
      %p316 = por %p314, %p315
      %p317 = scmp.ne.s32.totalorder %s303, %s304
      %p318 = scmp.eq.s32.totalorder %s34, 1
      %p319 = por %p317, %p318
      %p321 = scmp.ne.s32.totalorder %s304, %s320
      %p322 = scmp.eq.s32.totalorder %s34, 0
      %p323 = por %p321, %p322
      %p324 = scmp.le.s32.totalorder 1, %s28
      %p325 = scmp.lt.s32.totalorder %s28, 3
      %p326 = pnand %p324, %p325
      %p327 = pneg %p326
      // Predicated region
      $region9: #{tpu_custom_call.1} parent=5 // pred_check
        _
      $region10: #{tpu_custom_call.1} parent=5 // pred_check_branch
        %329 = sbr.rel (%p326) target = $region12
      $region11: #{tpu_custom_call.1} parent=5 // pred_region
        %s330 = ssub.s32 %s28, 1
        // Predicated region
        $region13: #{tpu_custom_call.1} parent=11 // pred_check
          %p331 = pneg %p141
        $region14: #{tpu_custom_call.1} parent=11 // pred_check_branch
          %333 = sbr.rel (%p331) target = $region16
        $region15: #{tpu_custom_call.1} parent=11 // pred_region
          %s335 = ssub.s32 512, 512
          %336 = vsyncadd [#allocation9], %s335
          %s337 = sshll.u32 [#allocation8], 4
          %s338 = int_to_ptr.vmem [resolvable:$true] %s337
          %343 = dma.hbm_to_vmem [thread:$0]  %s3, 512, %s338, [#allocation9], 128, 128, 8
        $region16: #{tpu_custom_call.1} parent=11 // pred_fallthru
          _
        // Predicated region
        $region17: #{tpu_custom_call.1} parent=11 // pred_check
          %p344 = pneg %p162
        $region18: #{tpu_custom_call.1} parent=11 // pred_check_branch
          %346 = sbr.rel (%p344) target = $region20
        $region19: #{tpu_custom_call.1} parent=11 // pred_region
          _
        $region20: #{tpu_custom_call.1} parent=11 // pred_fallthru
          _
        // Predicated region
        $region21: #{tpu_custom_call.1} parent=11 // pred_check
          %p347 = pneg %p183
        $region22: #{tpu_custom_call.1} parent=11 // pred_check_branch
          %349 = sbr.rel (%p347) target = $region24
        $region23: #{tpu_custom_call.1} parent=11 // pred_region
          %s351 = ssub.s32 512, 512
          %352 = vsyncadd [#allocation9], %s351
          %s353 = sshll.u32 [#allocation10], 4
          %s354 = int_to_ptr.vmem [resolvable:$true] %s353
          %359 = dma.hbm_to_vmem [thread:$0]  %s5, 512, %s354, [#allocation9], 128, 128, 8
        $region24: #{tpu_custom_call.1} parent=11 // pred_fallthru
          _
        // Predicated region
        $region25: #{tpu_custom_call.1} parent=11 // pred_check
          %p360 = pneg %p204
        $region26: #{tpu_custom_call.1} parent=11 // pred_check_branch
          %362 = sbr.rel (%p360) target = $region28
        $region27: #{tpu_custom_call.1} parent=11 // pred_region
          _
        $region28: #{tpu_custom_call.1} parent=11 // pred_fallthru
          _
        // Predicated region
        $region29: #{tpu_custom_call.1} parent=11 // pred_check
          %p363 = pneg %p225
        $region30: #{tpu_custom_call.1} parent=11 // pred_check_branch
          %365 = sbr.rel (%p363) target = $region32
        $region31: #{tpu_custom_call.1} parent=11 // pred_region
          %s367 = ssub.s32 512, 512
          %368 = vsyncadd [#allocation12], %s367
          %s369 = sshll.u32 [#allocation11], 4
          %s370 = int_to_ptr.vmem [resolvable:$true] %s369
          %375 = dma.hbm_to_vmem [thread:$0]  %s7, 512, %s370, [#allocation12], 128, 128, 8
        $region32: #{tpu_custom_call.1} parent=11 // pred_fallthru
          _
        // Predicated region
        $region33: #{tpu_custom_call.1} parent=11 // pred_check
          %p376 = pneg %p246
        $region34: #{tpu_custom_call.1} parent=11 // pred_check_branch
          %378 = sbr.rel (%p376) target = $region36
        $region35: #{tpu_custom_call.1} parent=11 // pred_region
          %s380 = ssub.s32 16, 16
          %381 = vsyncadd [#allocation12], %s380
          %s383 = sshll.u32 [#allocation13], 4
          %s384 = int_to_ptr.vmem [resolvable:$true] %s383
          %386 = dma.hbm_to_vmem [thread:$0]  %s8, 16, %s384, [#allocation12]
        $region36: #{tpu_custom_call.1} parent=11 // pred_fallthru
          _
        // Predicated region
        $region37: #{tpu_custom_call.1} parent=11 // pred_check
          %p387 = pneg %p267
        $region38: #{tpu_custom_call.1} parent=11 // pred_check_branch
          %389 = sbr.rel (%p387) target = $region40
        $region39: #{tpu_custom_call.1} parent=11 // pred_region
          _
        $region40: #{tpu_custom_call.1} parent=11 // pred_fallthru
          _
        // Predicated region
        $region41: #{tpu_custom_call.1} parent=11 // pred_check
          %p390 = pneg %p288
        $region42: #{tpu_custom_call.1} parent=11 // pred_check_branch
          %392 = sbr.rel (%p390) target = $region44
        $region43: #{tpu_custom_call.1} parent=11 // pred_region
          _
        $region44: #{tpu_custom_call.1} parent=11 // pred_fallthru
          _
      $region12: #{tpu_custom_call.1} parent=5 // pred_fallthru
        _
      %p393 = scmp.lt.s32.totalorder %s28, 2
      // Predicated region
      $region45: #{tpu_custom_call.1} parent=5 // pred_check
        %p394 = pneg %p393
      $region46: #{tpu_custom_call.1} parent=5 // pred_check_branch
        %396 = sbr.rel (%p394) target = $region48
      $region47: #{tpu_custom_call.1} parent=5 // pred_region
        // Predicated region
        $region49: #{tpu_custom_call.1} parent=47 // pred_check
          %p397 = pneg %p62
        $region50: #{tpu_custom_call.1} parent=47 // pred_check_branch
          %399 = sbr.rel (%p397) target = $region52
        $region51: #{tpu_custom_call.1} parent=47 // pred_region
          %s400 = sand.u32 %s52, 1
          %s401 = scalar_lea.sflag [#allocation3], %s400
          %s402 = sand.u32 %s52, 1
          %s403 = smul.addr %s402, 8
          %s404 = scalar_lea.vmem [#allocation2], %s403
          %s406 = ssub.s32 128, 128
          %407 = vsyncadd %s401, %s406
          %s408 = sadd.s32 %s36, %s35
          %s409 = smul.addr %s408, 128
          %s410 = scalar_lea.hbm %s0, %s409
          %s412 = sshll.u32 %s404, 4
          %s413 = int_to_ptr.vmem [resolvable:$true] %s412
          %415 = dma.hbm_to_vmem [thread:$0]  %s410, 128, %s413, %s401
        $region52: #{tpu_custom_call.1} parent=47 // pred_fallthru
          _
        // Predicated region
        $region53: #{tpu_custom_call.1} parent=47 // pred_check
          %p416 = pneg %p88
        $region54: #{tpu_custom_call.1} parent=47 // pred_check_branch
          %418 = sbr.rel (%p416) target = $region56
        $region55: #{tpu_custom_call.1} parent=47 // pred_region
          %s419 = sand.u32 %s28, 1
          %s420 = scalar_lea.sflag [#allocation6], %s419
          %s421 = sand.u32 %s78, 1
          %s422 = smul.addr %s421, 8
          %s423 = scalar_lea.vmem [#allocation5], %s422
          %s425 = ssub.s32 128, 128
          %426 = vsyncadd %s420, %s425
          %s427 = smul.addr %s35, 128
          %s428 = scalar_lea.hbm %s1, %s427
          %s430 = sshll.u32 %s423, 4
          %s431 = int_to_ptr.vmem [resolvable:$true] %s430
          %433 = dma.hbm_to_vmem [thread:$0]  %s428, 128, %s431, %s420
        $region56: #{tpu_custom_call.1} parent=47 // pred_fallthru
          _
        // Predicated region
        $region57: #{tpu_custom_call.1} parent=47 // pred_check
          %p434 = pneg %p114
        $region58: #{tpu_custom_call.1} parent=47 // pred_check_branch
          %436 = sbr.rel (%p434) target = $region60
        $region59: #{tpu_custom_call.1} parent=47 // pred_region
          %s437 = sand.u32 %s28, 1
          %s438 = scalar_lea.sflag [#allocation6], %s437
          %s439 = sand.u32 %s104, 1
          %s440 = smul.addr %s439, 8
          %s441 = scalar_lea.vmem [#allocation7], %s440
          %s443 = ssub.s32 128, 128
          %444 = vsyncadd %s438, %s443
          %s445 = smul.addr %s35, 128
          %s446 = scalar_lea.hbm %s2, %s445
          %s448 = sshll.u32 %s441, 4
          %s449 = int_to_ptr.vmem [resolvable:$true] %s448
          %451 = dma.hbm_to_vmem [thread:$0]  %s446, 128, %s449, %s438
        $region60: #{tpu_custom_call.1} parent=47 // pred_fallthru
          _
      $region48: #{tpu_custom_call.1} parent=5 // pred_fallthru
        _
      %p452 = scmp.le.s32.totalorder 1, %s28
      %p453 = scmp.lt.s32.totalorder %s28, 3
      %p454 = pnand %p452, %p453
      %p455 = pneg %p454
      // Predicated region
      $region61: #{tpu_custom_call.1} parent=5 // pred_check
        _
      $region62: #{tpu_custom_call.1} parent=5 // pred_check_branch
        %457 = sbr.rel (%p454) target = $region64
      $region63: #{tpu_custom_call.1} parent=5 // pred_region
        %s458 = ssub.s32 %s28, 1
        %s459 = sand.u32 %s55, 1
        %s460 = scalar_lea.sflag [#allocation3], %s459
        %s461 = sand.u32 %s55, 1
        %s462 = smul.addr %s461, 8
        %s463 = scalar_lea.vmem [#allocation2], %s462
        // Predicated region
        $region65: #{tpu_custom_call.1} parent=63 // pred_check
          %p464 = pneg %p68
        $region66: #{tpu_custom_call.1} parent=63 // pred_check_branch
          %466 = sbr.rel (%p464) target = $region68
        $region67: #{tpu_custom_call.1} parent=63 // pred_region
          %467 = dma.done %s460, 128
        $region68: #{tpu_custom_call.1} parent=63 // pred_fallthru
          _
        %s468 = sand.u32 %s33, 1
        %s469 = scalar_lea.sflag [#allocation6], %s468
        %s470 = sand.u32 %s81, 1
        %s471 = smul.addr %s470, 8
        %s472 = scalar_lea.vmem [#allocation5], %s471
        // Predicated region
        $region69: #{tpu_custom_call.1} parent=63 // pred_check
          %p473 = pneg %p94
        $region70: #{tpu_custom_call.1} parent=63 // pred_check_branch
          %475 = sbr.rel (%p473) target = $region72
        $region71: #{tpu_custom_call.1} parent=63 // pred_region
          %476 = dma.done %s469, 128
        $region72: #{tpu_custom_call.1} parent=63 // pred_fallthru
          _
        %s477 = sand.u32 %s33, 1
        %s478 = scalar_lea.sflag [#allocation6], %s477
        %s479 = sand.u32 %s107, 1
        %s480 = smul.addr %s479, 8
        %s481 = scalar_lea.vmem [#allocation7], %s480
        // Predicated region
        $region73: #{tpu_custom_call.1} parent=63 // pred_check
          %p482 = pneg %p120
        $region74: #{tpu_custom_call.1} parent=63 // pred_check_branch
          %484 = sbr.rel (%p482) target = $region76
        $region75: #{tpu_custom_call.1} parent=63 // pred_region
          %485 = dma.done %s478, 128
        $region76: #{tpu_custom_call.1} parent=63 // pred_fallthru
          _
        // Predicated region
        $region77: #{tpu_custom_call.1} parent=63 // pred_check
          %p486 = pneg %p141
        $region78: #{tpu_custom_call.1} parent=63 // pred_check_branch
          %488 = sbr.rel (%p486) target = $region80
        $region79: #{tpu_custom_call.1} parent=63 // pred_region
          %489 = dma.done [#allocation9], 512
        $region80: #{tpu_custom_call.1} parent=63 // pred_fallthru
          _
        // Predicated region
        $region81: #{tpu_custom_call.1} parent=63 // pred_check
          %p490 = pneg %p183
        $region82: #{tpu_custom_call.1} parent=63 // pred_check_branch
          %492 = sbr.rel (%p490) target = $region84
        $region83: #{tpu_custom_call.1} parent=63 // pred_region
          %493 = dma.done [#allocation9], 512
        $region84: #{tpu_custom_call.1} parent=63 // pred_fallthru
          _
        // Predicated region
        $region85: #{tpu_custom_call.1} parent=63 // pred_check
          %p494 = pneg %p225
        $region86: #{tpu_custom_call.1} parent=63 // pred_check_branch
          %496 = sbr.rel (%p494) target = $region88
        $region87: #{tpu_custom_call.1} parent=63 // pred_region
          %497 = dma.done [#allocation12], 512
        $region88: #{tpu_custom_call.1} parent=63 // pred_fallthru
          _
        // Predicated region
        $region89: #{tpu_custom_call.1} parent=63 // pred_check
          %p498 = pneg %p246
        $region90: #{tpu_custom_call.1} parent=63 // pred_check_branch
          %500 = sbr.rel (%p498) target = $region92
        $region91: #{tpu_custom_call.1} parent=63 // pred_region
          %501 = dma.done [#allocation12], 16
        $region92: #{tpu_custom_call.1} parent=63 // pred_fallthru
          _
        %s502 = sand.u32 %s55, 1
        %s503 = scalar_lea.sflag [#allocation3], %s502
        %s504 = sand.u32 %s55, 1
        %s505 = smul.addr %s504, 8
        %s506 = scalar_lea.vmem [#allocation2], %s505
        %p507 = pneg %p68
        %p508 = pneg %p65
        %s509 = sand.u32 %s33, 1
        %s510 = scalar_lea.sflag [#allocation6], %s509
        %s511 = sand.u32 %s81, 1
        %s512 = smul.addr %s511, 8
        %s513 = scalar_lea.vmem [#allocation5], %s512
        %p514 = pneg %p94
        %p515 = pneg %p91
        %s516 = sand.u32 %s33, 1
        %s517 = scalar_lea.sflag [#allocation6], %s516
        %s518 = sand.u32 %s107, 1
        %s519 = smul.addr %s518, 8
        %s520 = scalar_lea.vmem [#allocation7], %s519
        %p521 = pneg %p120
        %p522 = pneg %p117
        %p523 = pneg %p141
        %p524 = pneg %p138
        %p525 = pneg %p162
        %p526 = pneg %p159
        %p527 = pneg %p183
        %p528 = pneg %p180
        %p529 = pneg %p204
        %p530 = pneg %p201
        %p531 = pneg %p225
        %p532 = pneg %p222
        %p533 = pneg %p246
        %p534 = pneg %p243
        %p535 = pneg %p267
        %p536 = pneg %p264
        %p537 = pneg %p288
        %p538 = pneg %p285
        %p539 = pneg %p316
        %p540 = pneg %p313
        %s541 = sand.u32 %s303, 1
        %s542 = scalar_lea.sflag [#allocation4], %s541
        %s543 = sand.u32 %s303, 1
        %s544 = smul.addr %s543, 8
        %s545 = scalar_lea.vmem [#allocation14], %s544
        %v546 = vld [vmem:[%s463] sm:$0xff]
        %v547 = vld [vmem:[%s472] sm:$0xff]
        %v548 = vld [vmem:[%s481] sm:$0xff]
        %v549 = vld [vmem:[#allocation8] sm:$0xff]
        %v550 = vld [vmem:[#allocation8 + $0x8] sm:$0xff]
        %v551 = vld [vmem:[#allocation8 + $0x10] sm:$0xff]
        %v552 = vld [vmem:[#allocation8 + $0x18] sm:$0xff]
        %v553 = vld [vmem:[%s4] sm:$0x1]
        %v555 = vlaneseq
        %v556 = vshrl.u32 %v555, 7
        %v557 = vsub.s32 0, %v556
        %v558 = vrot.slane %v553, %v557
        %vm560 = vcmask 261120
        %v562 = vsel %vm560, %v546, 0
        %564 = vmatprep.subr.mxu0 0.0
        %565 = vmatpush1.msra.mxu0 %v549
        %566 = vmatprep.subr.mxu0 0.0
        %567 = vmatpush1.msra.mxu0 %v550
        %568 = vmatprep.subr.mxu0 0.0
        %569 = vmatpush1.msra.mxu0 %v551
        %570 = vmatprep.subr.mxu0 0.0
        %571 = vmatpush1.msra.mxu0 %v552
        %572 = vmatprep.subr.mxu0 0.0
        %573 = vmatpush1.msra.mxu0 0.0
        %574 = vmatprep.subr.mxu0 0.0
        %575 = vmatpush1.msra.mxu0 0.0
        %576 = vmatprep.subr.mxu0 0.0
        %577 = vmatpush1.msra.mxu0 0.0
        %578 = vmatprep.subr.mxu0 0.0
        %579 = vmatpush1.msra.mxu0 0.0
        %580 = vmatprep.subr.mxu0 0.0
        %581 = vmatpush1.msra.mxu0 0.0
        %582 = vmatprep.subr.mxu0 0.0
        %583 = vmatpush1.msra.mxu0 0.0
        %584 = vmatprep.subr.mxu0 0.0
        %585 = vmatpush1.msra.mxu0 0.0
        %586 = vmatprep.subr.mxu0 0.0
        %587 = vmatpush1.msra.mxu0 0.0
        %588 = vmatprep.subr.mxu0 0.0
        %589 = vmatpush1.msra.mxu0 0.0
        %590 = vmatprep.subr.mxu0 0.0
        %591 = vmatpush1.msra.mxu0 0.0
        %592 = vmatprep.subr.mxu0 0.0
        %593 = vmatpush1.msra.mxu0 0.0
        %594 = vmatprep.subr.mxu0 0.0
        %595 = vmatpush1.msra.mxu0 0.0
        %596 = vmatprep.subr.mxu0 0.0
        %597 = vmatpush1.msra.mxu0 0.0
        %598 = vmatprep.subr.mxu0 0.0
        %599 = vmatpush1.msra.mxu0 0.0
        %600 = vmatprep.subr.mxu0 0.0
        %601 = vmatpush1.msra.mxu0 0.0
        %602 = vmatprep.subr.mxu0 0.0
        %603 = vmatpush1.msra.mxu0 0.0
        %604 = vmatprep.subr.mxu0 0.0
        %605 = vmatpush1.msra.mxu0 0.0
        %606 = vmatprep.subr.mxu0 0.0
        %607 = vmatpush1.msra.mxu0 0.0
        %608 = vmatprep.subr.mxu0 0.0
        %609 = vmatpush1.msra.mxu0 0.0
        %610 = vmatprep.subr.mxu0 0.0
        %611 = vmatpush1.msra.mxu0 0.0
        %612 = vmatprep.subr.mxu0 0.0
        %613 = vmatpush1.msra.mxu0 0.0
        %614 = vmatprep.subr.mxu0 0.0
        %615 = vmatpush1.msra.mxu0 0.0
        %616 = vmatprep.subr.mxu0 0.0
        %617 = vmatpush1.msra.mxu0 0.0
        %618 = vmatprep.subr.mxu0 0.0
        %619 = vmatpush1.msra.mxu0 0.0
        %620 = vmatprep.subr.mxu0 0.0
        %621 = vmatpush1.msra.mxu0 0.0
        %622 = vmatprep.subr.mxu0 0.0
        %623 = vmatpush1.msra.mxu0 0.0
        %624 = vmatprep.subr.mxu0 0.0
        %625 = vmatpush1.msra.mxu0 0.0
        %626 = vmatprep.subr.mxu0 0.0
        %627 = vmatpush1.msra.mxu0 0.0
        %628 = vmatprep.mubr.f32.mxu0 0.0
        %629 = vmatmul.mubr.f32.gmra.mrb[0].mxu0 %v562
        %v630 = vpop.f32.mrb[0].mxu0
        %v631 = vadd.f32 %v558, %v630
        %v632 = vpop.f32.mrb[0].mxu0
        %633 = vdwg.mxu0
        %v634 = vld [vmem:[#allocation10] sm:$0xff]
        %v635 = vld [vmem:[#allocation10 + $0x8] sm:$0xff]
        %v636 = vld [vmem:[#allocation10 + $0x10] sm:$0xff]
        %v637 = vld [vmem:[#allocation10 + $0x18] sm:$0xff]
        %v638 = vld [vmem:[%s6] sm:$0x1]
        %v640 = vlaneseq
        %v641 = vshrl.u32 %v640, 7
        %v642 = vsub.s32 0, %v641
        %v643 = vrot.slane %v638, %v642
        %v646 = vsel %vm560, %v547, 0
        %648 = vmatprep.subr.mxu0 0.0
        %649 = vmatpush1.msra.mxu0 %v634
        %650 = vmatprep.subr.mxu0 0.0
        %651 = vmatpush1.msra.mxu0 %v635
        %652 = vmatprep.subr.mxu0 0.0
        %653 = vmatpush1.msra.mxu0 %v636
        %654 = vmatprep.subr.mxu0 0.0
        %655 = vmatpush1.msra.mxu0 %v637
        %656 = vmatprep.subr.mxu0 0.0
        %657 = vmatpush1.msra.mxu0 0.0
        %658 = vmatprep.subr.mxu0 0.0
        %659 = vmatpush1.msra.mxu0 0.0
        %660 = vmatprep.subr.mxu0 0.0
        %661 = vmatpush1.msra.mxu0 0.0
        %662 = vmatprep.subr.mxu0 0.0
        %663 = vmatpush1.msra.mxu0 0.0
        %664 = vmatprep.subr.mxu0 0.0
        %665 = vmatpush1.msra.mxu0 0.0
        %666 = vmatprep.subr.mxu0 0.0
        %667 = vmatpush1.msra.mxu0 0.0
        %668 = vmatprep.subr.mxu0 0.0
        %669 = vmatpush1.msra.mxu0 0.0
        %670 = vmatprep.subr.mxu0 0.0
        %671 = vmatpush1.msra.mxu0 0.0
        %672 = vmatprep.subr.mxu0 0.0
        %673 = vmatpush1.msra.mxu0 0.0
        %674 = vmatprep.subr.mxu0 0.0
        %675 = vmatpush1.msra.mxu0 0.0
        %676 = vmatprep.subr.mxu0 0.0
        %677 = vmatpush1.msra.mxu0 0.0
        %678 = vmatprep.subr.mxu0 0.0
        %679 = vmatpush1.msra.mxu0 0.0
        %680 = vmatprep.subr.mxu0 0.0
        %681 = vmatpush1.msra.mxu0 0.0
        %682 = vmatprep.subr.mxu0 0.0
        %683 = vmatpush1.msra.mxu0 0.0
        %684 = vmatprep.subr.mxu0 0.0
        %685 = vmatpush1.msra.mxu0 0.0
        %686 = vmatprep.subr.mxu0 0.0
        %687 = vmatpush1.msra.mxu0 0.0
        %688 = vmatprep.subr.mxu0 0.0
        %689 = vmatpush1.msra.mxu0 0.0
        %690 = vmatprep.subr.mxu0 0.0
        %691 = vmatpush1.msra.mxu0 0.0
        %692 = vmatprep.subr.mxu0 0.0
        %693 = vmatpush1.msra.mxu0 0.0
        %694 = vmatprep.subr.mxu0 0.0
        %695 = vmatpush1.msra.mxu0 0.0
        %696 = vmatprep.subr.mxu0 0.0
        %697 = vmatpush1.msra.mxu0 0.0
        %698 = vmatprep.subr.mxu0 0.0
        %699 = vmatpush1.msra.mxu0 0.0
        %700 = vmatprep.subr.mxu0 0.0
        %701 = vmatpush1.msra.mxu0 0.0
        %702 = vmatprep.subr.mxu0 0.0
        %703 = vmatpush1.msra.mxu0 0.0
        %704 = vmatprep.subr.mxu0 0.0
        %705 = vmatpush1.msra.mxu0 0.0
        %706 = vmatprep.subr.mxu0 0.0
        %707 = vmatpush1.msra.mxu0 0.0
        %708 = vmatprep.subr.mxu0 0.0
        %709 = vmatpush1.msra.mxu0 0.0
        %710 = vmatprep.subr.mxu0 0.0
        %711 = vmatpush1.msra.mxu0 0.0
        %712 = vmatprep.mubr.f32.mxu0 0.0
        %713 = vmatmul.mubr.f32.gmra.mrb[0].mxu0 %v646
        %v714 = vpop.f32.mrb[0].mxu0
        %v715 = vadd.f32 %v643, %v714
        %v716 = vpop.f32.mrb[0].mxu0
        %717 = vdwg.mxu0
        %v718 = vld [vmem:[#allocation11] sm:$0xff]
        %v719 = vld [vmem:[#allocation11 + $0x8] sm:$0xff]
        %v720 = vld [vmem:[#allocation11 + $0x10] sm:$0xff]
        %v721 = vld [vmem:[#allocation11 + $0x18] sm:$0xff]
        %v722 = vld [vmem:[#allocation13] sm:$0x1]
        %v724 = vlaneseq
        %v725 = vshrl.u32 %v724, 7
        %v726 = vsub.s32 0, %v725
        %v727 = vrot.slane %v722, %v726
        %v730 = vsel %vm560, %v548, 0
        %732 = vmatprep.subr.mxu0 0.0
        %733 = vmatpush1.msra.mxu0 %v718
        %734 = vmatprep.subr.mxu0 0.0
        %735 = vmatpush1.msra.mxu0 %v719
        %736 = vmatprep.subr.mxu0 0.0
        %737 = vmatpush1.msra.mxu0 %v720
        %738 = vmatprep.subr.mxu0 0.0
        %739 = vmatpush1.msra.mxu0 %v721
        %740 = vmatprep.subr.mxu0 0.0
        %741 = vmatpush1.msra.mxu0 0.0
        %742 = vmatprep.subr.mxu0 0.0
        %743 = vmatpush1.msra.mxu0 0.0
        %744 = vmatprep.subr.mxu0 0.0
        %745 = vmatpush1.msra.mxu0 0.0
        %746 = vmatprep.subr.mxu0 0.0
        %747 = vmatpush1.msra.mxu0 0.0
        %748 = vmatprep.subr.mxu0 0.0
        %749 = vmatpush1.msra.mxu0 0.0
        %750 = vmatprep.subr.mxu0 0.0
        %751 = vmatpush1.msra.mxu0 0.0
        %752 = vmatprep.subr.mxu0 0.0
        %753 = vmatpush1.msra.mxu0 0.0
        %754 = vmatprep.subr.mxu0 0.0
        %755 = vmatpush1.msra.mxu0 0.0
        %756 = vmatprep.subr.mxu0 0.0
        %757 = vmatpush1.msra.mxu0 0.0
        %758 = vmatprep.subr.mxu0 0.0
        %759 = vmatpush1.msra.mxu0 0.0
        %760 = vmatprep.subr.mxu0 0.0
        %761 = vmatpush1.msra.mxu0 0.0
        %762 = vmatprep.subr.mxu0 0.0
        %763 = vmatpush1.msra.mxu0 0.0
        %764 = vmatprep.subr.mxu0 0.0
        %765 = vmatpush1.msra.mxu0 0.0
        %766 = vmatprep.subr.mxu0 0.0
        %767 = vmatpush1.msra.mxu0 0.0
        %768 = vmatprep.subr.mxu0 0.0
        %769 = vmatpush1.msra.mxu0 0.0
        %770 = vmatprep.subr.mxu0 0.0
        %771 = vmatpush1.msra.mxu0 0.0
        %772 = vmatprep.subr.mxu0 0.0
        %773 = vmatpush1.msra.mxu0 0.0
        %774 = vmatprep.subr.mxu0 0.0
        %775 = vmatpush1.msra.mxu0 0.0
        %776 = vmatprep.subr.mxu0 0.0
        %777 = vmatpush1.msra.mxu0 0.0
        %778 = vmatprep.subr.mxu0 0.0
        %779 = vmatpush1.msra.mxu0 0.0
        %780 = vmatprep.subr.mxu0 0.0
        %781 = vmatpush1.msra.mxu0 0.0
        %782 = vmatprep.subr.mxu0 0.0
        %783 = vmatpush1.msra.mxu0 0.0
        %784 = vmatprep.subr.mxu0 0.0
        %785 = vmatpush1.msra.mxu0 0.0
        %786 = vmatprep.subr.mxu0 0.0
        %787 = vmatpush1.msra.mxu0 0.0
        %788 = vmatprep.subr.mxu0 0.0
        %789 = vmatpush1.msra.mxu0 0.0
        %790 = vmatprep.subr.mxu0 0.0
        %791 = vmatpush1.msra.mxu0 0.0
        %792 = vmatprep.subr.mxu0 0.0
        %793 = vmatpush1.msra.mxu0 0.0
        %794 = vmatprep.subr.mxu0 0.0
        %795 = vmatpush1.msra.mxu0 0.0
        %796 = vmatprep.mubr.f32.mxu0 0.0
        %797 = vmatmul.mubr.f32.gmra.mrb[0].mxu0 %v730
        %v798 = vpop.f32.mrb[0].mxu0
        %v799 = vadd.f32 %v727, %v798
        %v800 = vpop.f32.mrb[0].mxu0
        %801 = vdwg.mxu0
        %803 = vrot.lane.b32.xlu0 %v631, 120
        %v804 = vpop.permute.xlu0 %803
        %806 = vrot.lane.b32.xlu0 %v631, 112
        %v807 = vpop.permute.xlu0 %806
        %809 = vrot.lane.b32.xlu0 %v631, 104
        %v810 = vpop.permute.xlu0 %809
        %v812 = vcombine.low %v631, %v807
        %v813 = vcombine.high %v631, %v807
        %v815 = vunpack.c.l.s4 1983009808
        %v816 = vunpack.c.0.s8 %v815
        %v817 = vlaneseq
        %v818 = vshrl.u32 %v817, 7
        %v819 = vsub.s32 %v816, %v818
        %v820 = vrot.slane %v812, %v819
        %v822 = vunpack.c.l.s4 1983009808
        %v823 = vunpack.c.0.s8 %v822
        %v824 = vlaneseq
        %v825 = vshrl.u32 %v824, 7
        %v826 = vsub.s32 %v823, %v825
        %v827 = vrot.slane %v813, %v826
        %v828 = vcombine.low %v804, %v810
        %v829 = vcombine.high %v804, %v810
        %v831 = vunpack.c.l.s4 1983009808
        %v832 = vunpack.c.0.s8 %v831
        %v833 = vlaneseq
        %v834 = vshrl.u32 %v833, 7
        %v835 = vsub.s32 %v832, %v834
        %v836 = vrot.slane %v828, %v835
        %v838 = vunpack.c.l.s4 1983009808
        %v839 = vunpack.c.0.s8 %v838
        %v840 = vlaneseq
        %v841 = vshrl.u32 %v840, 7
        %v842 = vsub.s32 %v839, %v841
        %v843 = vrot.slane %v829, %v842
        %v844 = vcombine.low %v820, %v836
        %v845 = vcombine.high %v820, %v836
        %v847 = vunpack.c.l.s4 1934713408
        %v848 = vunpack.c.0.s8 %v847
        %v849 = vlaneseq
        %v850 = vshrl.u32 %v849, 7
        %v851 = vsub.s32 %v848, %v850
        %v852 = vrot.slane %v844, %v851
        %v854 = vunpack.c.l.s4 1934713408
        %v855 = vunpack.c.0.s8 %v854
        %v856 = vlaneseq
        %v857 = vshrl.u32 %v856, 7
        %v858 = vsub.s32 %v855, %v857
        %v859 = vrot.slane %v845, %v858
        %v860 = vcombine.low %v827, %v843
        %v861 = vcombine.high %v827, %v843
        %v863 = vunpack.c.l.s4 1934713408
        %v864 = vunpack.c.0.s8 %v863
        %v865 = vlaneseq
        %v866 = vshrl.u32 %v865, 7
        %v867 = vsub.s32 %v864, %v866
        %v868 = vrot.slane %v860, %v867
        %v870 = vunpack.c.l.s4 1934713408
        %v871 = vunpack.c.0.s8 %v870
        %v872 = vlaneseq
        %v873 = vshrl.u32 %v872, 7
        %v874 = vsub.s32 %v871, %v873
        %v875 = vrot.slane %v861, %v874
        %v876 = vcombine.high %v852, 0.0
        %v877 = vcombine.high %v859, 0.0
        %v878 = vcombine.high %v868, 0.0
        %v879 = vcombine.high %v875, 0.0
        %v880 = vcombine.low %v852, %v859
        %v882 = vunpack.c.l.s4 1983009808
        %v883 = vunpack.c.0.s8 %v882
        %v884 = vlaneseq
        %v885 = vshrl.u32 %v884, 7
        %v886 = vsub.s32 %v883, %v885
        %v887 = vrot.slane %v880, %v886
        %v888 = vcombine.low %v876, %v877
        %v890 = vunpack.c.l.s4 1983009808
        %v891 = vunpack.c.0.s8 %v890
        %v892 = vlaneseq
        %v893 = vshrl.u32 %v892, 7
        %v894 = vsub.s32 %v891, %v893
        %v895 = vrot.slane %v888, %v894
        %v896 = vcombine.low %v868, %v875
        %v898 = vunpack.c.l.s4 1983009808
        %v899 = vunpack.c.0.s8 %v898
        %v900 = vlaneseq
        %v901 = vshrl.u32 %v900, 7
        %v902 = vsub.s32 %v899, %v901
        %v903 = vrot.slane %v896, %v902
        %v904 = vcombine.low %v878, %v879
        %v906 = vunpack.c.l.s4 1983009808
        %v907 = vunpack.c.0.s8 %v906
        %v908 = vlaneseq
        %v909 = vshrl.u32 %v908, 7
        %v910 = vsub.s32 %v907, %v909
        %v911 = vrot.slane %v904, %v910
        %v912 = vcombine.low %v887, %v895
        %v913 = vcombine.high %v887, %v895
        %v915 = vunpack.c.l.s4 1934713408
        %v916 = vunpack.c.0.s8 %v915
        %v917 = vlaneseq
        %v918 = vshrl.u32 %v917, 7
        %v919 = vsub.s32 %v916, %v918
        %v920 = vrot.slane %v912, %v919
        %v922 = vunpack.c.l.s4 1934713408
        %v923 = vunpack.c.0.s8 %v922
        %v924 = vlaneseq
        %v925 = vshrl.u32 %v924, 7
        %v926 = vsub.s32 %v923, %v925
        %v927 = vrot.slane %v913, %v926
        %v928 = vcombine.low %v903, %v911
        %v929 = vcombine.high %v903, %v911
        %v931 = vunpack.c.l.s4 1934713408
        %v932 = vunpack.c.0.s8 %v931
        %v933 = vlaneseq
        %v934 = vshrl.u32 %v933, 7
        %v935 = vsub.s32 %v932, %v934
        %v936 = vrot.slane %v928, %v935
        %v938 = vunpack.c.l.s4 1934713408
        %v939 = vunpack.c.0.s8 %v938
        %v940 = vlaneseq
        %v941 = vshrl.u32 %v940, 7
        %v942 = vsub.s32 %v939, %v941
        %v943 = vrot.slane %v929, %v942
        %v944 = vcombine.low %v920, %v936
        %v945 = vcombine.high %v920, %v936
        %v946 = vcombine.low %v927, %v943
        %v947 = vcombine.high %v927, %v943
        %949 = vrot.lane.b32.xlu0 %v715, 120
        %v950 = vpop.permute.xlu0 %949
        %952 = vrot.lane.b32.xlu0 %v715, 112
        %v953 = vpop.permute.xlu0 %952
        %955 = vrot.lane.b32.xlu0 %v715, 104
        %v956 = vpop.permute.xlu0 %955
        %v958 = vcombine.low %v715, %v953
        %v959 = vcombine.high %v715, %v953
        %v961 = vunpack.c.l.s4 1983009808
        %v962 = vunpack.c.0.s8 %v961
        %v963 = vlaneseq
        %v964 = vshrl.u32 %v963, 7
        %v965 = vsub.s32 %v962, %v964
        %v966 = vrot.slane %v958, %v965
        %v968 = vunpack.c.l.s4 1983009808
        %v969 = vunpack.c.0.s8 %v968
        %v970 = vlaneseq
        %v971 = vshrl.u32 %v970, 7
        %v972 = vsub.s32 %v969, %v971
        %v973 = vrot.slane %v959, %v972
        %v974 = vcombine.low %v950, %v956
        %v975 = vcombine.high %v950, %v956
        %v977 = vunpack.c.l.s4 1983009808
        %v978 = vunpack.c.0.s8 %v977
        %v979 = vlaneseq
        %v980 = vshrl.u32 %v979, 7
        %v981 = vsub.s32 %v978, %v980
        %v982 = vrot.slane %v974, %v981
        %v984 = vunpack.c.l.s4 1983009808
        %v985 = vunpack.c.0.s8 %v984
        %v986 = vlaneseq
        %v987 = vshrl.u32 %v986, 7
        %v988 = vsub.s32 %v985, %v987
        %v989 = vrot.slane %v975, %v988
        %v990 = vcombine.low %v966, %v982
        %v991 = vcombine.high %v966, %v982
        %v993 = vunpack.c.l.s4 1934713408
        %v994 = vunpack.c.0.s8 %v993
        %v995 = vlaneseq
        %v996 = vshrl.u32 %v995, 7
        %v997 = vsub.s32 %v994, %v996
        %v998 = vrot.slane %v990, %v997
        %v1000 = vunpack.c.l.s4 1934713408
        %v1001 = vunpack.c.0.s8 %v1000
        %v1002 = vlaneseq
        %v1003 = vshrl.u32 %v1002, 7
        %v1004 = vsub.s32 %v1001, %v1003
        %v1005 = vrot.slane %v991, %v1004
        %v1006 = vcombine.low %v973, %v989
        %v1007 = vcombine.high %v973, %v989
        %v1009 = vunpack.c.l.s4 1934713408
        %v1010 = vunpack.c.0.s8 %v1009
        %v1011 = vlaneseq
        %v1012 = vshrl.u32 %v1011, 7
        %v1013 = vsub.s32 %v1010, %v1012
        %v1014 = vrot.slane %v1006, %v1013
        %v1016 = vunpack.c.l.s4 1934713408
        %v1017 = vunpack.c.0.s8 %v1016
        %v1018 = vlaneseq
        %v1019 = vshrl.u32 %v1018, 7
        %v1020 = vsub.s32 %v1017, %v1019
        %v1021 = vrot.slane %v1007, %v1020
        %v1022 = vcombine.high %v998, 0.0
        %v1023 = vcombine.high %v1005, 0.0
        %v1024 = vcombine.high %v1014, 0.0
        %v1025 = vcombine.high %v1021, 0.0
        %v1026 = vcombine.low %v998, %v1005
        %v1028 = vunpack.c.l.s4 1983009808
        %v1029 = vunpack.c.0.s8 %v1028
        %v1030 = vlaneseq
        %v1031 = vshrl.u32 %v1030, 7
        %v1032 = vsub.s32 %v1029, %v1031
        %v1033 = vrot.slane %v1026, %v1032
        %v1034 = vcombine.low %v1022, %v1023
        %v1036 = vunpack.c.l.s4 1983009808
        %v1037 = vunpack.c.0.s8 %v1036
        %v1038 = vlaneseq
        %v1039 = vshrl.u32 %v1038, 7
        %v1040 = vsub.s32 %v1037, %v1039
        %v1041 = vrot.slane %v1034, %v1040
        %v1042 = vcombine.low %v1014, %v1021
        %v1044 = vunpack.c.l.s4 1983009808
        %v1045 = vunpack.c.0.s8 %v1044
        %v1046 = vlaneseq
        %v1047 = vshrl.u32 %v1046, 7
        %v1048 = vsub.s32 %v1045, %v1047
        %v1049 = vrot.slane %v1042, %v1048
        %v1050 = vcombine.low %v1024, %v1025
        %v1052 = vunpack.c.l.s4 1983009808
        %v1053 = vunpack.c.0.s8 %v1052
        %v1054 = vlaneseq
        %v1055 = vshrl.u32 %v1054, 7
        %v1056 = vsub.s32 %v1053, %v1055
        %v1057 = vrot.slane %v1050, %v1056
        %v1058 = vcombine.low %v1033, %v1041
        %v1059 = vcombine.high %v1033, %v1041
        %v1061 = vunpack.c.l.s4 1934713408
        %v1062 = vunpack.c.0.s8 %v1061
        %v1063 = vlaneseq
        %v1064 = vshrl.u32 %v1063, 7
        %v1065 = vsub.s32 %v1062, %v1064
        %v1066 = vrot.slane %v1058, %v1065
        %v1068 = vunpack.c.l.s4 1934713408
        %v1069 = vunpack.c.0.s8 %v1068
        %v1070 = vlaneseq
        %v1071 = vshrl.u32 %v1070, 7
        %v1072 = vsub.s32 %v1069, %v1071
        %v1073 = vrot.slane %v1059, %v1072
        %v1074 = vcombine.low %v1049, %v1057
        %v1075 = vcombine.high %v1049, %v1057
        %v1077 = vunpack.c.l.s4 1934713408
        %v1078 = vunpack.c.0.s8 %v1077
        %v1079 = vlaneseq
        %v1080 = vshrl.u32 %v1079, 7
        %v1081 = vsub.s32 %v1078, %v1080
        %v1082 = vrot.slane %v1074, %v1081
        %v1084 = vunpack.c.l.s4 1934713408
        %v1085 = vunpack.c.0.s8 %v1084
        %v1086 = vlaneseq
        %v1087 = vshrl.u32 %v1086, 7
        %v1088 = vsub.s32 %v1085, %v1087
        %v1089 = vrot.slane %v1075, %v1088
        %v1090 = vcombine.low %v1066, %v1082
        %v1091 = vcombine.high %v1066, %v1082
        %v1092 = vcombine.low %v1073, %v1089
        %v1093 = vcombine.high %v1073, %v1089
        %1095 = vrot.lane.b32.xlu0 %v799, 120
        %v1096 = vpop.permute.xlu0 %1095
        %1098 = vrot.lane.b32.xlu0 %v799, 112
        %v1099 = vpop.permute.xlu0 %1098
        %1101 = vrot.lane.b32.xlu0 %v799, 104
        %v1102 = vpop.permute.xlu0 %1101
        %v1104 = vcombine.low %v799, %v1099
        %v1105 = vcombine.high %v799, %v1099
        %v1107 = vunpack.c.l.s4 1983009808
        %v1108 = vunpack.c.0.s8 %v1107
        %v1109 = vlaneseq
        %v1110 = vshrl.u32 %v1109, 7
        %v1111 = vsub.s32 %v1108, %v1110
        %v1112 = vrot.slane %v1104, %v1111
        %v1114 = vunpack.c.l.s4 1983009808
        %v1115 = vunpack.c.0.s8 %v1114
        %v1116 = vlaneseq
        %v1117 = vshrl.u32 %v1116, 7
        %v1118 = vsub.s32 %v1115, %v1117
        %v1119 = vrot.slane %v1105, %v1118
        %v1120 = vcombine.low %v1096, %v1102
        %v1121 = vcombine.high %v1096, %v1102
        %v1123 = vunpack.c.l.s4 1983009808
        %v1124 = vunpack.c.0.s8 %v1123
        %v1125 = vlaneseq
        %v1126 = vshrl.u32 %v1125, 7
        %v1127 = vsub.s32 %v1124, %v1126
        %v1128 = vrot.slane %v1120, %v1127
        %v1130 = vunpack.c.l.s4 1983009808
        %v1131 = vunpack.c.0.s8 %v1130
        %v1132 = vlaneseq
        %v1133 = vshrl.u32 %v1132, 7
        %v1134 = vsub.s32 %v1131, %v1133
        %v1135 = vrot.slane %v1121, %v1134
        %v1136 = vcombine.low %v1112, %v1128
        %v1137 = vcombine.high %v1112, %v1128
        %v1139 = vunpack.c.l.s4 1934713408
        %v1140 = vunpack.c.0.s8 %v1139
        %v1141 = vlaneseq
        %v1142 = vshrl.u32 %v1141, 7
        %v1143 = vsub.s32 %v1140, %v1142
        %v1144 = vrot.slane %v1136, %v1143
        %v1146 = vunpack.c.l.s4 1934713408
        %v1147 = vunpack.c.0.s8 %v1146
        %v1148 = vlaneseq
        %v1149 = vshrl.u32 %v1148, 7
        %v1150 = vsub.s32 %v1147, %v1149
        %v1151 = vrot.slane %v1137, %v1150
        %v1152 = vcombine.low %v1119, %v1135
        %v1153 = vcombine.high %v1119, %v1135
        %v1155 = vunpack.c.l.s4 1934713408
        %v1156 = vunpack.c.0.s8 %v1155
        %v1157 = vlaneseq
        %v1158 = vshrl.u32 %v1157, 7
        %v1159 = vsub.s32 %v1156, %v1158
        %v1160 = vrot.slane %v1152, %v1159
        %v1162 = vunpack.c.l.s4 1934713408
        %v1163 = vunpack.c.0.s8 %v1162
        %v1164 = vlaneseq
        %v1165 = vshrl.u32 %v1164, 7
        %v1166 = vsub.s32 %v1163, %v1165
        %v1167 = vrot.slane %v1153, %v1166
        %v1168 = vcombine.high %v1144, 0.0
        %v1169 = vcombine.high %v1151, 0.0
        %v1170 = vcombine.high %v1160, 0.0
        %v1171 = vcombine.high %v1167, 0.0
        %v1172 = vcombine.low %v1144, %v1151
        %v1174 = vunpack.c.l.s4 1983009808
        %v1175 = vunpack.c.0.s8 %v1174
        %v1176 = vlaneseq
        %v1177 = vshrl.u32 %v1176, 7
        %v1178 = vsub.s32 %v1175, %v1177
        %v1179 = vrot.slane %v1172, %v1178
        %v1180 = vcombine.low %v1168, %v1169
        %v1182 = vunpack.c.l.s4 1983009808
        %v1183 = vunpack.c.0.s8 %v1182
        %v1184 = vlaneseq
        %v1185 = vshrl.u32 %v1184, 7
        %v1186 = vsub.s32 %v1183, %v1185
        %v1187 = vrot.slane %v1180, %v1186
        %v1188 = vcombine.low %v1160, %v1167
        %v1190 = vunpack.c.l.s4 1983009808
        %v1191 = vunpack.c.0.s8 %v1190
        %v1192 = vlaneseq
        %v1193 = vshrl.u32 %v1192, 7
        %v1194 = vsub.s32 %v1191, %v1193
        %v1195 = vrot.slane %v1188, %v1194
        %v1196 = vcombine.low %v1170, %v1171
        %v1198 = vunpack.c.l.s4 1983009808
        %v1199 = vunpack.c.0.s8 %v1198
        %v1200 = vlaneseq
        %v1201 = vshrl.u32 %v1200, 7
        %v1202 = vsub.s32 %v1199, %v1201
        %v1203 = vrot.slane %v1196, %v1202
        %v1204 = vcombine.low %v1179, %v1187
        %v1205 = vcombine.high %v1179, %v1187
        %v1207 = vunpack.c.l.s4 1934713408
        %v1208 = vunpack.c.0.s8 %v1207
        %v1209 = vlaneseq
        %v1210 = vshrl.u32 %v1209, 7
        %v1211 = vsub.s32 %v1208, %v1210
        %v1212 = vrot.slane %v1204, %v1211
        %v1214 = vunpack.c.l.s4 1934713408
        %v1215 = vunpack.c.0.s8 %v1214
        %v1216 = vlaneseq
        %v1217 = vshrl.u32 %v1216, 7
        %v1218 = vsub.s32 %v1215, %v1217
        %v1219 = vrot.slane %v1205, %v1218
        %v1220 = vcombine.low %v1195, %v1203
        %v1221 = vcombine.high %v1195, %v1203
        %v1223 = vunpack.c.l.s4 1934713408
        %v1224 = vunpack.c.0.s8 %v1223
        %v1225 = vlaneseq
        %v1226 = vshrl.u32 %v1225, 7
        %v1227 = vsub.s32 %v1224, %v1226
        %v1228 = vrot.slane %v1220, %v1227
        %v1230 = vunpack.c.l.s4 1934713408
        %v1231 = vunpack.c.0.s8 %v1230
        %v1232 = vlaneseq
        %v1233 = vshrl.u32 %v1232, 7
        %v1234 = vsub.s32 %v1231, %v1233
        %v1235 = vrot.slane %v1221, %v1234
        %v1236 = vcombine.low %v1212, %v1228
        %v1237 = vcombine.high %v1212, %v1228
        %v1238 = vcombine.low %v1219, %v1235
        %v1239 = vcombine.high %v1219, %v1235
        %vm1240 = vcmask 64512
        %v1242 = vsel %vm1240, %v944, 0
        %v1245 = vsel %vm1240, %v1090, 0
        %1247 = vmatprep.subr.mxu0 0.0
        %1248 = vmatpush1.xpose.msra.mxu0 %v1245
        %1249 = vmatprep.subr.mxu0 0.0
        %1250 = vmatpush1.xpose.msra.mxu0 0.0
        %1251 = vmatprep.subr.mxu0 0.0
        %1252 = vmatpush1.xpose.msra.mxu0 0.0
        %1253 = vmatprep.subr.mxu0 0.0
        %1254 = vmatpush1.xpose.msra.mxu0 0.0
        %1255 = vmatprep.subr.mxu0 0.0
        %1256 = vmatpush1.xpose.msra.mxu0 0.0
        %1257 = vmatprep.subr.mxu0 0.0
        %1258 = vmatpush1.xpose.msra.mxu0 0.0
        %1259 = vmatprep.subr.mxu0 0.0
        %1260 = vmatpush1.xpose.msra.mxu0 0.0
        %1261 = vmatprep.subr.mxu0 0.0
        %1262 = vmatpush1.xpose.msra.mxu0 0.0
        %1263 = vmatprep.subr.mxu0 0.0
        %1264 = vmatpush1.xpose.msra.mxu0 0.0
        %1265 = vmatprep.subr.mxu0 0.0
        %1266 = vmatpush1.xpose.msra.mxu0 0.0
        %1267 = vmatprep.subr.mxu0 0.0
        %1268 = vmatpush1.xpose.msra.mxu0 0.0
        %1269 = vmatprep.subr.mxu0 0.0
        %1270 = vmatpush1.xpose.msra.mxu0 0.0
        %1271 = vmatprep.subr.mxu0 0.0
        %1272 = vmatpush1.xpose.msra.mxu0 0.0
        %1273 = vmatprep.subr.mxu0 0.0
        %1274 = vmatpush1.xpose.msra.mxu0 0.0
        %1275 = vmatprep.subr.mxu0 0.0
        %1276 = vmatpush1.xpose.msra.mxu0 0.0
        %1277 = vmatprep.subr.mxu0 0.0
        %1278 = vmatpush1.xpose.msra.mxu0 0.0
        %1279 = vmatprep.subr.mxu0 0.0
        %1280 = vmatpush1.xpose.msra.mxu0 0.0
        %1281 = vmatprep.subr.mxu0 0.0
        %1282 = vmatpush1.xpose.msra.mxu0 0.0
        %1283 = vmatprep.subr.mxu0 0.0
        %1284 = vmatpush1.xpose.msra.mxu0 0.0
        %1285 = vmatprep.subr.mxu0 0.0
        %1286 = vmatpush1.xpose.msra.mxu0 0.0
        %1287 = vmatprep.subr.mxu0 0.0
        %1288 = vmatpush1.xpose.msra.mxu0 0.0
        %1289 = vmatprep.subr.mxu0 0.0
        %1290 = vmatpush1.xpose.msra.mxu0 0.0
        %1291 = vmatprep.subr.mxu0 0.0
        %1292 = vmatpush1.xpose.msra.mxu0 0.0
        %1293 = vmatprep.subr.mxu0 0.0
        %1294 = vmatpush1.xpose.msra.mxu0 0.0
        %1295 = vmatprep.subr.mxu0 0.0
        %1296 = vmatpush1.xpose.msra.mxu0 0.0
        %1297 = vmatprep.subr.mxu0 0.0
        %1298 = vmatpush1.xpose.msra.mxu0 0.0
        %1299 = vmatprep.subr.mxu0 0.0
        %1300 = vmatpush1.xpose.msra.mxu0 0.0
        %1301 = vmatprep.subr.mxu0 0.0
        %1302 = vmatpush1.xpose.msra.mxu0 0.0
        %1303 = vmatprep.subr.mxu0 0.0
        %1304 = vmatpush1.xpose.msra.mxu0 0.0
        %1305 = vmatprep.subr.mxu0 0.0
        %1306 = vmatpush1.xpose.msra.mxu0 0.0
        %1307 = vmatprep.subr.mxu0 0.0
        %1308 = vmatpush1.xpose.msra.mxu0 0.0
        %1309 = vmatprep.subr.mxu0 0.0
        %1310 = vmatpush1.xpose.msra.mxu0 0.0
        %1311 = vmatprep.mubr.f32.mxu0 0.0
        %1312 = vmatmul.mubr.f32.gmra.mrb[0].mxu0 %v1242
        %v1313 = vpop.f32.mrb[0].mxu0
        %v1314 = vadd.f32 0.0, %v1313
        %v1315 = vpop.f32.mrb[0].mxu0
        %1316 = vdwg.mxu0
        %v1318 = vsel %vm1240, %v945, 0
        %v1321 = vsel %vm1240, %v1091, 0
        %1323 = vmatprep.subr.mxu0 0.0
        %1324 = vmatpush1.xpose.msra.mxu0 %v1321
        %1325 = vmatprep.subr.mxu0 0.0
        %1326 = vmatpush1.xpose.msra.mxu0 0.0
        %1327 = vmatprep.subr.mxu0 0.0
        %1328 = vmatpush1.xpose.msra.mxu0 0.0
        %1329 = vmatprep.subr.mxu0 0.0
        %1330 = vmatpush1.xpose.msra.mxu0 0.0
        %1331 = vmatprep.subr.mxu0 0.0
        %1332 = vmatpush1.xpose.msra.mxu0 0.0
        %1333 = vmatprep.subr.mxu0 0.0
        %1334 = vmatpush1.xpose.msra.mxu0 0.0
        %1335 = vmatprep.subr.mxu0 0.0
        %1336 = vmatpush1.xpose.msra.mxu0 0.0
        %1337 = vmatprep.subr.mxu0 0.0
        %1338 = vmatpush1.xpose.msra.mxu0 0.0
        %1339 = vmatprep.subr.mxu0 0.0
        %1340 = vmatpush1.xpose.msra.mxu0 0.0
        %1341 = vmatprep.subr.mxu0 0.0
        %1342 = vmatpush1.xpose.msra.mxu0 0.0
        %1343 = vmatprep.subr.mxu0 0.0
        %1344 = vmatpush1.xpose.msra.mxu0 0.0
        %1345 = vmatprep.subr.mxu0 0.0
        %1346 = vmatpush1.xpose.msra.mxu0 0.0
        %1347 = vmatprep.subr.mxu0 0.0
        %1348 = vmatpush1.xpose.msra.mxu0 0.0
        %1349 = vmatprep.subr.mxu0 0.0
        %1350 = vmatpush1.xpose.msra.mxu0 0.0
        %1351 = vmatprep.subr.mxu0 0.0
        %1352 = vmatpush1.xpose.msra.mxu0 0.0
        %1353 = vmatprep.subr.mxu0 0.0
        %1354 = vmatpush1.xpose.msra.mxu0 0.0
        %1355 = vmatprep.subr.mxu0 0.0
        %1356 = vmatpush1.xpose.msra.mxu0 0.0
        %1357 = vmatprep.subr.mxu0 0.0
        %1358 = vmatpush1.xpose.msra.mxu0 0.0
        %1359 = vmatprep.subr.mxu0 0.0
        %1360 = vmatpush1.xpose.msra.mxu0 0.0
        %1361 = vmatprep.subr.mxu0 0.0
        %1362 = vmatpush1.xpose.msra.mxu0 0.0
        %1363 = vmatprep.subr.mxu0 0.0
        %1364 = vmatpush1.xpose.msra.mxu0 0.0
        %1365 = vmatprep.subr.mxu0 0.0
        %1366 = vmatpush1.xpose.msra.mxu0 0.0
        %1367 = vmatprep.subr.mxu0 0.0
        %1368 = vmatpush1.xpose.msra.mxu0 0.0
        %1369 = vmatprep.subr.mxu0 0.0
        %1370 = vmatpush1.xpose.msra.mxu0 0.0
        %1371 = vmatprep.subr.mxu0 0.0
        %1372 = vmatpush1.xpose.msra.mxu0 0.0
        %1373 = vmatprep.subr.mxu0 0.0
        %1374 = vmatpush1.xpose.msra.mxu0 0.0
        %1375 = vmatprep.subr.mxu0 0.0
        %1376 = vmatpush1.xpose.msra.mxu0 0.0
        %1377 = vmatprep.subr.mxu0 0.0
        %1378 = vmatpush1.xpose.msra.mxu0 0.0
        %1379 = vmatprep.subr.mxu0 0.0
        %1380 = vmatpush1.xpose.msra.mxu0 0.0
        %1381 = vmatprep.subr.mxu0 0.0
        %1382 = vmatpush1.xpose.msra.mxu0 0.0
        %1383 = vmatprep.subr.mxu0 0.0
        %1384 = vmatpush1.xpose.msra.mxu0 0.0
        %1385 = vmatprep.subr.mxu0 0.0
        %1386 = vmatpush1.xpose.msra.mxu0 0.0
        %1387 = vmatprep.mubr.f32.mxu0 0.0
        %1388 = vmatmul.mubr.f32.gmra.mrb[0].mxu0 %v1318
        %v1389 = vpop.f32.mrb[0].mxu0
        %v1390 = vadd.f32 0.0, %v1389
        %v1391 = vpop.f32.mrb[0].mxu0
        %1392 = vdwg.mxu0
        %v1394 = vsel %vm1240, %v946, 0
        %v1397 = vsel %vm1240, %v1092, 0
        %1399 = vmatprep.subr.mxu0 0.0
        %1400 = vmatpush1.xpose.msra.mxu0 %v1397
        %1401 = vmatprep.subr.mxu0 0.0
        %1402 = vmatpush1.xpose.msra.mxu0 0.0
        %1403 = vmatprep.subr.mxu0 0.0
        %1404 = vmatpush1.xpose.msra.mxu0 0.0
        %1405 = vmatprep.subr.mxu0 0.0
        %1406 = vmatpush1.xpose.msra.mxu0 0.0
        %1407 = vmatprep.subr.mxu0 0.0
        %1408 = vmatpush1.xpose.msra.mxu0 0.0
        %1409 = vmatprep.subr.mxu0 0.0
        %1410 = vmatpush1.xpose.msra.mxu0 0.0
        %1411 = vmatprep.subr.mxu0 0.0
        %1412 = vmatpush1.xpose.msra.mxu0 0.0
        %1413 = vmatprep.subr.mxu0 0.0
        %1414 = vmatpush1.xpose.msra.mxu0 0.0
        %1415 = vmatprep.subr.mxu0 0.0
        %1416 = vmatpush1.xpose.msra.mxu0 0.0
        %1417 = vmatprep.subr.mxu0 0.0
        %1418 = vmatpush1.xpose.msra.mxu0 0.0
        %1419 = vmatprep.subr.mxu0 0.0
        %1420 = vmatpush1.xpose.msra.mxu0 0.0
        %1421 = vmatprep.subr.mxu0 0.0
        %1422 = vmatpush1.xpose.msra.mxu0 0.0
        %1423 = vmatprep.subr.mxu0 0.0
        %1424 = vmatpush1.xpose.msra.mxu0 0.0
        %1425 = vmatprep.subr.mxu0 0.0
        %1426 = vmatpush1.xpose.msra.mxu0 0.0
        %1427 = vmatprep.subr.mxu0 0.0
        %1428 = vmatpush1.xpose.msra.mxu0 0.0
        %1429 = vmatprep.subr.mxu0 0.0
        %1430 = vmatpush1.xpose.msra.mxu0 0.0
        %1431 = vmatprep.subr.mxu0 0.0
        %1432 = vmatpush1.xpose.msra.mxu0 0.0
        %1433 = vmatprep.subr.mxu0 0.0
        %1434 = vmatpush1.xpose.msra.mxu0 0.0
        %1435 = vmatprep.subr.mxu0 0.0
        %1436 = vmatpush1.xpose.msra.mxu0 0.0
        %1437 = vmatprep.subr.mxu0 0.0
        %1438 = vmatpush1.xpose.msra.mxu0 0.0
        %1439 = vmatprep.subr.mxu0 0.0
        %1440 = vmatpush1.xpose.msra.mxu0 0.0
        %1441 = vmatprep.subr.mxu0 0.0
        %1442 = vmatpush1.xpose.msra.mxu0 0.0
        %1443 = vmatprep.subr.mxu0 0.0
        %1444 = vmatpush1.xpose.msra.mxu0 0.0
        %1445 = vmatprep.subr.mxu0 0.0
        %1446 = vmatpush1.xpose.msra.mxu0 0.0
        %1447 = vmatprep.subr.mxu0 0.0
        %1448 = vmatpush1.xpose.msra.mxu0 0.0
        %1449 = vmatprep.subr.mxu0 0.0
        %1450 = vmatpush1.xpose.msra.mxu0 0.0
        %1451 = vmatprep.subr.mxu0 0.0
        %1452 = vmatpush1.xpose.msra.mxu0 0.0
        %1453 = vmatprep.subr.mxu0 0.0
        %1454 = vmatpush1.xpose.msra.mxu0 0.0
        %1455 = vmatprep.subr.mxu0 0.0
        %1456 = vmatpush1.xpose.msra.mxu0 0.0
        %1457 = vmatprep.subr.mxu0 0.0
        %1458 = vmatpush1.xpose.msra.mxu0 0.0
        %1459 = vmatprep.subr.mxu0 0.0
        %1460 = vmatpush1.xpose.msra.mxu0 0.0
        %1461 = vmatprep.subr.mxu0 0.0
        %1462 = vmatpush1.xpose.msra.mxu0 0.0
        %1463 = vmatprep.mubr.f32.mxu0 0.0
        %1464 = vmatmul.mubr.f32.gmra.mrb[0].mxu0 %v1394
        %v1465 = vpop.f32.mrb[0].mxu0
        %v1466 = vadd.f32 0.0, %v1465
        %v1467 = vpop.f32.mrb[0].mxu0
        %1468 = vdwg.mxu0
        %v1470 = vsel %vm1240, %v947, 0
        %v1473 = vsel %vm1240, %v1093, 0
        %1475 = vmatprep.subr.mxu0 0.0
        %1476 = vmatpush1.xpose.msra.mxu0 %v1473
        %1477 = vmatprep.subr.mxu0 0.0
        %1478 = vmatpush1.xpose.msra.mxu0 0.0
        %1479 = vmatprep.subr.mxu0 0.0
        %1480 = vmatpush1.xpose.msra.mxu0 0.0
        %1481 = vmatprep.subr.mxu0 0.0
        %1482 = vmatpush1.xpose.msra.mxu0 0.0
        %1483 = vmatprep.subr.mxu0 0.0
        %1484 = vmatpush1.xpose.msra.mxu0 0.0
        %1485 = vmatprep.subr.mxu0 0.0
        %1486 = vmatpush1.xpose.msra.mxu0 0.0
        %1487 = vmatprep.subr.mxu0 0.0
        %1488 = vmatpush1.xpose.msra.mxu0 0.0
        %1489 = vmatprep.subr.mxu0 0.0
        %1490 = vmatpush1.xpose.msra.mxu0 0.0
        %1491 = vmatprep.subr.mxu0 0.0
        %1492 = vmatpush1.xpose.msra.mxu0 0.0
        %1493 = vmatprep.subr.mxu0 0.0
        %1494 = vmatpush1.xpose.msra.mxu0 0.0
        %1495 = vmatprep.subr.mxu0 0.0
        %1496 = vmatpush1.xpose.msra.mxu0 0.0
        %1497 = vmatprep.subr.mxu0 0.0
        %1498 = vmatpush1.xpose.msra.mxu0 0.0
        %1499 = vmatprep.subr.mxu0 0.0
        %1500 = vmatpush1.xpose.msra.mxu0 0.0
        %1501 = vmatprep.subr.mxu0 0.0
        %1502 = vmatpush1.xpose.msra.mxu0 0.0
        %1503 = vmatprep.subr.mxu0 0.0
        %1504 = vmatpush1.xpose.msra.mxu0 0.0
        %1505 = vmatprep.subr.mxu0 0.0
        %1506 = vmatpush1.xpose.msra.mxu0 0.0
        %1507 = vmatprep.subr.mxu0 0.0
        %1508 = vmatpush1.xpose.msra.mxu0 0.0
        %1509 = vmatprep.subr.mxu0 0.0
        %1510 = vmatpush1.xpose.msra.mxu0 0.0
        %1511 = vmatprep.subr.mxu0 0.0
        %1512 = vmatpush1.xpose.msra.mxu0 0.0
        %1513 = vmatprep.subr.mxu0 0.0
        %1514 = vmatpush1.xpose.msra.mxu0 0.0
        %1515 = vmatprep.subr.mxu0 0.0
        %1516 = vmatpush1.xpose.msra.mxu0 0.0
        %1517 = vmatprep.subr.mxu0 0.0
        %1518 = vmatpush1.xpose.msra.mxu0 0.0
        %1519 = vmatprep.subr.mxu0 0.0
        %1520 = vmatpush1.xpose.msra.mxu0 0.0
        %1521 = vmatprep.subr.mxu0 0.0
        %1522 = vmatpush1.xpose.msra.mxu0 0.0
        %1523 = vmatprep.subr.mxu0 0.0
        %1524 = vmatpush1.xpose.msra.mxu0 0.0
        %1525 = vmatprep.subr.mxu0 0.0
        %1526 = vmatpush1.xpose.msra.mxu0 0.0
        %1527 = vmatprep.subr.mxu0 0.0
        %1528 = vmatpush1.xpose.msra.mxu0 0.0
        %1529 = vmatprep.subr.mxu0 0.0
        %1530 = vmatpush1.xpose.msra.mxu0 0.0
        %1531 = vmatprep.subr.mxu0 0.0
        %1532 = vmatpush1.xpose.msra.mxu0 0.0
        %1533 = vmatprep.subr.mxu0 0.0
        %1534 = vmatpush1.xpose.msra.mxu0 0.0
        %1535 = vmatprep.subr.mxu0 0.0
        %1536 = vmatpush1.xpose.msra.mxu0 0.0
        %1537 = vmatprep.subr.mxu0 0.0
        %1538 = vmatpush1.xpose.msra.mxu0 0.0
        %1539 = vmatprep.mubr.f32.mxu0 0.0
        %1540 = vmatmul.mubr.f32.gmra.mrb[0].mxu0 %v1470
        %v1541 = vpop.f32.mrb[0].mxu0
        %v1542 = vadd.f32 0.0, %v1541
        %v1543 = vpop.f32.mrb[0].mxu0
        %1544 = vdwg.mxu0
        %v1545 = vsel %vm1240, %v1314, -inf
        %1546 = vmax.xlane.f32.xlu0 %v1545
        %v1547 = vpop.xlane.xlu0 %1546
        %v1548 = vsel %vm1240, %v1390, -inf
        %1549 = vmax.xlane.f32.xlu0 %v1548
        %v1550 = vpop.xlane.xlu0 %1549
        %v1551 = vsel %vm1240, %v1466, -inf
        %1552 = vmax.xlane.f32.xlu0 %v1551
        %v1553 = vpop.xlane.xlu0 %1552
        %v1554 = vsel %vm1240, %v1542, -inf
        %1555 = vmax.xlane.f32.xlu0 %v1554
        %v1556 = vpop.xlane.xlu0 %1555
        %v1557 = vsub.f32 %v1314, %v1547
        %v1558 = vsub.f32 %v1390, %v1550
        %v1559 = vsub.f32 %v1466, %v1553
        %v1560 = vsub.f32 %v1542, %v1556
        %v1561 = vmul.f32 %v1557, 1.442695
        %v1562 = vpow.pop %v1561
        %v1563 = vmul.f32 %v1558, 1.442695
        %v1564 = vpow.pop %v1563
        %v1565 = vmul.f32 %v1559, 1.442695
        %v1566 = vpow.pop %v1565
        %v1567 = vmul.f32 %v1560, 1.442695
        %v1568 = vpow.pop %v1567
        %v1569 = vsel %vm1240, %v1562, 0.0
        %1570 = vadd.xlane.f32.xlu0 %v1569
        %v1571 = vpop.xlane.xlu0 %1570
        %v1572 = vsel %vm1240, %v1564, 0.0
        %1573 = vadd.xlane.f32.xlu0 %v1572
        %v1574 = vpop.xlane.xlu0 %1573
        %v1575 = vsel %vm1240, %v1566, 0.0
        %1576 = vadd.xlane.f32.xlu0 %v1575
        %v1577 = vpop.xlane.xlu0 %1576
        %v1578 = vsel %vm1240, %v1568, 0.0
        %1579 = vadd.xlane.f32.xlu0 %v1578
        %v1580 = vpop.xlane.xlu0 %1579
        %v1581 = vrcp.pop %v1571
        %v1582 = vrcp.pop %v1574
        %v1583 = vrcp.pop %v1577
        %v1584 = vrcp.pop %v1580
        %v1585 = vmul.f32 %v1562, %v1581
        %v1586 = vmul.f32 %v1564, %v1582
        %v1587 = vmul.f32 %v1566, %v1583
        %v1588 = vmul.f32 %v1568, %v1584
        %v1590 = vsel %vm1240, %v1585, 0
        %1592 = vmatprep.subr.mxu0 0.0
        %1593 = vmatpush1.msra.mxu0 %v1236
        %1594 = vmatprep.subr.mxu0 0.0
        %1595 = vmatpush1.msra.mxu0 0.0
        %1596 = vmatprep.subr.mxu0 0.0
        %1597 = vmatpush1.msra.mxu0 0.0
        %1598 = vmatprep.subr.mxu0 0.0
        %1599 = vmatpush1.msra.mxu0 0.0
        %1600 = vmatprep.subr.mxu0 0.0
        %1601 = vmatpush1.msra.mxu0 0.0
        %1602 = vmatprep.subr.mxu0 0.0
        %1603 = vmatpush1.msra.mxu0 0.0
        %1604 = vmatprep.subr.mxu0 0.0
        %1605 = vmatpush1.msra.mxu0 0.0
        %1606 = vmatprep.subr.mxu0 0.0
        %1607 = vmatpush1.msra.mxu0 0.0
        %1608 = vmatprep.subr.mxu0 0.0
        %1609 = vmatpush1.msra.mxu0 0.0
        %1610 = vmatprep.subr.mxu0 0.0
        %1611 = vmatpush1.msra.mxu0 0.0
        %1612 = vmatprep.subr.mxu0 0.0
        %1613 = vmatpush1.msra.mxu0 0.0
        %1614 = vmatprep.subr.mxu0 0.0
        %1615 = vmatpush1.msra.mxu0 0.0
        %1616 = vmatprep.subr.mxu0 0.0
        %1617 = vmatpush1.msra.mxu0 0.0
        %1618 = vmatprep.subr.mxu0 0.0
        %1619 = vmatpush1.msra.mxu0 0.0
        %1620 = vmatprep.subr.mxu0 0.0
        %1621 = vmatpush1.msra.mxu0 0.0
        %1622 = vmatprep.subr.mxu0 0.0
        %1623 = vmatpush1.msra.mxu0 0.0
        %1624 = vmatprep.subr.mxu0 0.0
        %1625 = vmatpush1.msra.mxu0 0.0
        %1626 = vmatprep.subr.mxu0 0.0
        %1627 = vmatpush1.msra.mxu0 0.0
        %1628 = vmatprep.subr.mxu0 0.0
        %1629 = vmatpush1.msra.mxu0 0.0
        %1630 = vmatprep.subr.mxu0 0.0
        %1631 = vmatpush1.msra.mxu0 0.0
        %1632 = vmatprep.subr.mxu0 0.0
        %1633 = vmatpush1.msra.mxu0 0.0
        %1634 = vmatprep.subr.mxu0 0.0
        %1635 = vmatpush1.msra.mxu0 0.0
        %1636 = vmatprep.subr.mxu0 0.0
        %1637 = vmatpush1.msra.mxu0 0.0
        %1638 = vmatprep.subr.mxu0 0.0
        %1639 = vmatpush1.msra.mxu0 0.0
        %1640 = vmatprep.subr.mxu0 0.0
        %1641 = vmatpush1.msra.mxu0 0.0
        %1642 = vmatprep.subr.mxu0 0.0
        %1643 = vmatpush1.msra.mxu0 0.0
        %1644 = vmatprep.subr.mxu0 0.0
        %1645 = vmatpush1.msra.mxu0 0.0
        %1646 = vmatprep.subr.mxu0 0.0
        %1647 = vmatpush1.msra.mxu0 0.0
        %1648 = vmatprep.subr.mxu0 0.0
        %1649 = vmatpush1.msra.mxu0 0.0
        %1650 = vmatprep.subr.mxu0 0.0
        %1651 = vmatpush1.msra.mxu0 0.0
        %1652 = vmatprep.subr.mxu0 0.0
        %1653 = vmatpush1.msra.mxu0 0.0
        %1654 = vmatprep.subr.mxu0 0.0
        %1655 = vmatpush1.msra.mxu0 0.0
        %1656 = vmatprep.mubr.f32.mxu0 0.0
        %1657 = vmatmul.mubr.f32.gmra.mrb[0].mxu0 %v1590
        %v1658 = vpop.f32.mrb[0].mxu0
        %v1659 = vadd.f32 0.0, %v1658
        %v1660 = vpop.f32.mrb[0].mxu0
        %1661 = vdwg.mxu0
        %v1663 = vsel %vm1240, %v1586, 0
        %1665 = vmatprep.subr.mxu0 0.0
        %1666 = vmatpush1.msra.mxu0 %v1237
        %1667 = vmatprep.subr.mxu0 0.0
        %1668 = vmatpush1.msra.mxu0 0.0
        %1669 = vmatprep.subr.mxu0 0.0
        %1670 = vmatpush1.msra.mxu0 0.0
        %1671 = vmatprep.subr.mxu0 0.0
        %1672 = vmatpush1.msra.mxu0 0.0
        %1673 = vmatprep.subr.mxu0 0.0
        %1674 = vmatpush1.msra.mxu0 0.0
        %1675 = vmatprep.subr.mxu0 0.0
        %1676 = vmatpush1.msra.mxu0 0.0
        %1677 = vmatprep.subr.mxu0 0.0
        %1678 = vmatpush1.msra.mxu0 0.0
        %1679 = vmatprep.subr.mxu0 0.0
        %1680 = vmatpush1.msra.mxu0 0.0
        %1681 = vmatprep.subr.mxu0 0.0
        %1682 = vmatpush1.msra.mxu0 0.0
        %1683 = vmatprep.subr.mxu0 0.0
        %1684 = vmatpush1.msra.mxu0 0.0
        %1685 = vmatprep.subr.mxu0 0.0
        %1686 = vmatpush1.msra.mxu0 0.0
        %1687 = vmatprep.subr.mxu0 0.0
        %1688 = vmatpush1.msra.mxu0 0.0
        %1689 = vmatprep.subr.mxu0 0.0
        %1690 = vmatpush1.msra.mxu0 0.0
        %1691 = vmatprep.subr.mxu0 0.0
        %1692 = vmatpush1.msra.mxu0 0.0
        %1693 = vmatprep.subr.mxu0 0.0
        %1694 = vmatpush1.msra.mxu0 0.0
        %1695 = vmatprep.subr.mxu0 0.0
        %1696 = vmatpush1.msra.mxu0 0.0
        %1697 = vmatprep.subr.mxu0 0.0
        %1698 = vmatpush1.msra.mxu0 0.0
        %1699 = vmatprep.subr.mxu0 0.0
        %1700 = vmatpush1.msra.mxu0 0.0
        %1701 = vmatprep.subr.mxu0 0.0
        %1702 = vmatpush1.msra.mxu0 0.0
        %1703 = vmatprep.subr.mxu0 0.0
        %1704 = vmatpush1.msra.mxu0 0.0
        %1705 = vmatprep.subr.mxu0 0.0
        %1706 = vmatpush1.msra.mxu0 0.0
        %1707 = vmatprep.subr.mxu0 0.0
        %1708 = vmatpush1.msra.mxu0 0.0
        %1709 = vmatprep.subr.mxu0 0.0
        %1710 = vmatpush1.msra.mxu0 0.0
        %1711 = vmatprep.subr.mxu0 0.0
        %1712 = vmatpush1.msra.mxu0 0.0
        %1713 = vmatprep.subr.mxu0 0.0
        %1714 = vmatpush1.msra.mxu0 0.0
        %1715 = vmatprep.subr.mxu0 0.0
        %1716 = vmatpush1.msra.mxu0 0.0
        %1717 = vmatprep.subr.mxu0 0.0
        %1718 = vmatpush1.msra.mxu0 0.0
        %1719 = vmatprep.subr.mxu0 0.0
        %1720 = vmatpush1.msra.mxu0 0.0
        %1721 = vmatprep.subr.mxu0 0.0
        %1722 = vmatpush1.msra.mxu0 0.0
        %1723 = vmatprep.subr.mxu0 0.0
        %1724 = vmatpush1.msra.mxu0 0.0
        %1725 = vmatprep.subr.mxu0 0.0
        %1726 = vmatpush1.msra.mxu0 0.0
        %1727 = vmatprep.subr.mxu0 0.0
        %1728 = vmatpush1.msra.mxu0 0.0
        %1729 = vmatprep.mubr.f32.mxu0 0.0
        %1730 = vmatmul.mubr.f32.gmra.mrb[0].mxu0 %v1663
        %v1731 = vpop.f32.mrb[0].mxu0
        %v1732 = vadd.f32 0.0, %v1731
        %v1733 = vpop.f32.mrb[0].mxu0
        %1734 = vdwg.mxu0
        %v1736 = vsel %vm1240, %v1587, 0
        %1738 = vmatprep.subr.mxu0 0.0
        %1739 = vmatpush1.msra.mxu0 %v1238
        %1740 = vmatprep.subr.mxu0 0.0
        %1741 = vmatpush1.msra.mxu0 0.0
        %1742 = vmatprep.subr.mxu0 0.0
        %1743 = vmatpush1.msra.mxu0 0.0
        %1744 = vmatprep.subr.mxu0 0.0
        %1745 = vmatpush1.msra.mxu0 0.0
        %1746 = vmatprep.subr.mxu0 0.0
        %1747 = vmatpush1.msra.mxu0 0.0
        %1748 = vmatprep.subr.mxu0 0.0
        %1749 = vmatpush1.msra.mxu0 0.0
        %1750 = vmatprep.subr.mxu0 0.0
        %1751 = vmatpush1.msra.mxu0 0.0
        %1752 = vmatprep.subr.mxu0 0.0
        %1753 = vmatpush1.msra.mxu0 0.0
        %1754 = vmatprep.subr.mxu0 0.0
        %1755 = vmatpush1.msra.mxu0 0.0
        %1756 = vmatprep.subr.mxu0 0.0
        %1757 = vmatpush1.msra.mxu0 0.0
        %1758 = vmatprep.subr.mxu0 0.0
        %1759 = vmatpush1.msra.mxu0 0.0
        %1760 = vmatprep.subr.mxu0 0.0
        %1761 = vmatpush1.msra.mxu0 0.0
        %1762 = vmatprep.subr.mxu0 0.0
        %1763 = vmatpush1.msra.mxu0 0.0
        %1764 = vmatprep.subr.mxu0 0.0
        %1765 = vmatpush1.msra.mxu0 0.0
        %1766 = vmatprep.subr.mxu0 0.0
        %1767 = vmatpush1.msra.mxu0 0.0
        %1768 = vmatprep.subr.mxu0 0.0
        %1769 = vmatpush1.msra.mxu0 0.0
        %1770 = vmatprep.subr.mxu0 0.0
        %1771 = vmatpush1.msra.mxu0 0.0
        %1772 = vmatprep.subr.mxu0 0.0
        %1773 = vmatpush1.msra.mxu0 0.0
        %1774 = vmatprep.subr.mxu0 0.0
        %1775 = vmatpush1.msra.mxu0 0.0
        %1776 = vmatprep.subr.mxu0 0.0
        %1777 = vmatpush1.msra.mxu0 0.0
        %1778 = vmatprep.subr.mxu0 0.0
        %1779 = vmatpush1.msra.mxu0 0.0
        %1780 = vmatprep.subr.mxu0 0.0
        %1781 = vmatpush1.msra.mxu0 0.0
        %1782 = vmatprep.subr.mxu0 0.0
        %1783 = vmatpush1.msra.mxu0 0.0
        %1784 = vmatprep.subr.mxu0 0.0
        %1785 = vmatpush1.msra.mxu0 0.0
        %1786 = vmatprep.subr.mxu0 0.0
        %1787 = vmatpush1.msra.mxu0 0.0
        %1788 = vmatprep.subr.mxu0 0.0
        %1789 = vmatpush1.msra.mxu0 0.0
        %1790 = vmatprep.subr.mxu0 0.0
        %1791 = vmatpush1.msra.mxu0 0.0
        %1792 = vmatprep.subr.mxu0 0.0
        %1793 = vmatpush1.msra.mxu0 0.0
        %1794 = vmatprep.subr.mxu0 0.0
        %1795 = vmatpush1.msra.mxu0 0.0
        %1796 = vmatprep.subr.mxu0 0.0
        %1797 = vmatpush1.msra.mxu0 0.0
        %1798 = vmatprep.subr.mxu0 0.0
        %1799 = vmatpush1.msra.mxu0 0.0
        %1800 = vmatprep.subr.mxu0 0.0
        %1801 = vmatpush1.msra.mxu0 0.0
        %1802 = vmatprep.mubr.f32.mxu0 0.0
        %1803 = vmatmul.mubr.f32.gmra.mrb[0].mxu0 %v1736
        %v1804 = vpop.f32.mrb[0].mxu0
        %v1805 = vadd.f32 0.0, %v1804
        %v1806 = vpop.f32.mrb[0].mxu0
        %1807 = vdwg.mxu0
        %v1809 = vsel %vm1240, %v1588, 0
        %1811 = vmatprep.subr.mxu0 0.0
        %1812 = vmatpush1.msra.mxu0 %v1239
        %1813 = vmatprep.subr.mxu0 0.0
        %1814 = vmatpush1.msra.mxu0 0.0
        %1815 = vmatprep.subr.mxu0 0.0
        %1816 = vmatpush1.msra.mxu0 0.0
        %1817 = vmatprep.subr.mxu0 0.0
        %1818 = vmatpush1.msra.mxu0 0.0
        %1819 = vmatprep.subr.mxu0 0.0
        %1820 = vmatpush1.msra.mxu0 0.0
        %1821 = vmatprep.subr.mxu0 0.0
        %1822 = vmatpush1.msra.mxu0 0.0
        %1823 = vmatprep.subr.mxu0 0.0
        %1824 = vmatpush1.msra.mxu0 0.0
        %1825 = vmatprep.subr.mxu0 0.0
        %1826 = vmatpush1.msra.mxu0 0.0
        %1827 = vmatprep.subr.mxu0 0.0
        %1828 = vmatpush1.msra.mxu0 0.0
        %1829 = vmatprep.subr.mxu0 0.0
        %1830 = vmatpush1.msra.mxu0 0.0
        %1831 = vmatprep.subr.mxu0 0.0
        %1832 = vmatpush1.msra.mxu0 0.0
        %1833 = vmatprep.subr.mxu0 0.0
        %1834 = vmatpush1.msra.mxu0 0.0
        %1835 = vmatprep.subr.mxu0 0.0
        %1836 = vmatpush1.msra.mxu0 0.0
        %1837 = vmatprep.subr.mxu0 0.0
        %1838 = vmatpush1.msra.mxu0 0.0
        %1839 = vmatprep.subr.mxu0 0.0
        %1840 = vmatpush1.msra.mxu0 0.0
        %1841 = vmatprep.subr.mxu0 0.0
        %1842 = vmatpush1.msra.mxu0 0.0
        %1843 = vmatprep.subr.mxu0 0.0
        %1844 = vmatpush1.msra.mxu0 0.0
        %1845 = vmatprep.subr.mxu0 0.0
        %1846 = vmatpush1.msra.mxu0 0.0
        %1847 = vmatprep.subr.mxu0 0.0
        %1848 = vmatpush1.msra.mxu0 0.0
        %1849 = vmatprep.subr.mxu0 0.0
        %1850 = vmatpush1.msra.mxu0 0.0
        %1851 = vmatprep.subr.mxu0 0.0
        %1852 = vmatpush1.msra.mxu0 0.0
        %1853 = vmatprep.subr.mxu0 0.0
        %1854 = vmatpush1.msra.mxu0 0.0
        %1855 = vmatprep.subr.mxu0 0.0
        %1856 = vmatpush1.msra.mxu0 0.0
        %1857 = vmatprep.subr.mxu0 0.0
        %1858 = vmatpush1.msra.mxu0 0.0
        %1859 = vmatprep.subr.mxu0 0.0
        %1860 = vmatpush1.msra.mxu0 0.0
        %1861 = vmatprep.subr.mxu0 0.0
        %1862 = vmatpush1.msra.mxu0 0.0
        %1863 = vmatprep.subr.mxu0 0.0
        %1864 = vmatpush1.msra.mxu0 0.0
        %1865 = vmatprep.subr.mxu0 0.0
        %1866 = vmatpush1.msra.mxu0 0.0
        %1867 = vmatprep.subr.mxu0 0.0
        %1868 = vmatpush1.msra.mxu0 0.0
        %1869 = vmatprep.subr.mxu0 0.0
        %1870 = vmatpush1.msra.mxu0 0.0
        %1871 = vmatprep.subr.mxu0 0.0
        %1872 = vmatpush1.msra.mxu0 0.0
        %1873 = vmatprep.subr.mxu0 0.0
        %1874 = vmatpush1.msra.mxu0 0.0
        %1875 = vmatprep.mubr.f32.mxu0 0.0
        %1876 = vmatmul.mubr.f32.gmra.mrb[0].mxu0 %v1809
        %v1877 = vpop.f32.mrb[0].mxu0
        %v1878 = vadd.f32 0.0, %v1877
        %v1879 = vpop.f32.mrb[0].mxu0
        %1880 = vdwg.mxu0
        %v1881 = vcombine.low %v1659, %v1805
        %v1882 = vcombine.high %v1659, %v1805
        %v1884 = vunpack.c.l.s4 1983009808
        %v1885 = vunpack.c.0.s8 %v1884
        %v1886 = vlaneseq
        %v1887 = vshrl.u32 %v1886, 7
        %v1888 = vsub.s32 %v1885, %v1887
        %v1889 = vrot.slane %v1881, %v1888
        %v1891 = vunpack.c.l.s4 1983009808
        %v1892 = vunpack.c.0.s8 %v1891
        %v1893 = vlaneseq
        %v1894 = vshrl.u32 %v1893, 7
        %v1895 = vsub.s32 %v1892, %v1894
        %v1896 = vrot.slane %v1882, %v1895
        %v1897 = vcombine.low %v1732, %v1878
        %v1898 = vcombine.high %v1732, %v1878
        %v1900 = vunpack.c.l.s4 1983009808
        %v1901 = vunpack.c.0.s8 %v1900
        %v1902 = vlaneseq
        %v1903 = vshrl.u32 %v1902, 7
        %v1904 = vsub.s32 %v1901, %v1903
        %v1905 = vrot.slane %v1897, %v1904
        %v1907 = vunpack.c.l.s4 1983009808
        %v1908 = vunpack.c.0.s8 %v1907
        %v1909 = vlaneseq
        %v1910 = vshrl.u32 %v1909, 7
        %v1911 = vsub.s32 %v1908, %v1910
        %v1912 = vrot.slane %v1898, %v1911
        %v1913 = vcombine.low %v1889, %v1905
        %v1914 = vcombine.high %v1889, %v1905
        %v1916 = vunpack.c.l.s4 1934713408
        %v1917 = vunpack.c.0.s8 %v1916
        %v1918 = vlaneseq
        %v1919 = vshrl.u32 %v1918, 7
        %v1920 = vsub.s32 %v1917, %v1919
        %v1921 = vrot.slane %v1913, %v1920
        %v1923 = vunpack.c.l.s4 1934713408
        %v1924 = vunpack.c.0.s8 %v1923
        %v1925 = vlaneseq
        %v1926 = vshrl.u32 %v1925, 7
        %v1927 = vsub.s32 %v1924, %v1926
        %v1928 = vrot.slane %v1914, %v1927
        %v1929 = vcombine.low %v1896, %v1912
        %v1930 = vcombine.high %v1896, %v1912
        %v1932 = vunpack.c.l.s4 1934713408
        %v1933 = vunpack.c.0.s8 %v1932
        %v1934 = vlaneseq
        %v1935 = vshrl.u32 %v1934, 7
        %v1936 = vsub.s32 %v1933, %v1935
        %v1937 = vrot.slane %v1929, %v1936
        %v1939 = vunpack.c.l.s4 1934713408
        %v1940 = vunpack.c.0.s8 %v1939
        %v1941 = vlaneseq
        %v1942 = vshrl.u32 %v1941, 7
        %v1943 = vsub.s32 %v1940, %v1942
        %v1944 = vrot.slane %v1930, %v1943
        %v1945 = vcombine.high %v1921, 0.0
        %v1946 = vcombine.high %v1928, 0.0
        %v1947 = vcombine.high %v1937, 0.0
        %v1948 = vcombine.high %v1944, 0.0
        %v1949 = vcombine.low %v1921, %v1928
        %v1951 = vunpack.c.l.s4 1983009808
        %v1952 = vunpack.c.0.s8 %v1951
        %v1953 = vlaneseq
        %v1954 = vshrl.u32 %v1953, 7
        %v1955 = vsub.s32 %v1952, %v1954
        %v1956 = vrot.slane %v1949, %v1955
        %v1957 = vcombine.low %v1945, %v1946
        %v1959 = vunpack.c.l.s4 1983009808
        %v1960 = vunpack.c.0.s8 %v1959
        %v1961 = vlaneseq
        %v1962 = vshrl.u32 %v1961, 7
        %v1963 = vsub.s32 %v1960, %v1962
        %v1964 = vrot.slane %v1957, %v1963
        %v1965 = vcombine.low %v1937, %v1944
        %v1967 = vunpack.c.l.s4 1983009808
        %v1968 = vunpack.c.0.s8 %v1967
        %v1969 = vlaneseq
        %v1970 = vshrl.u32 %v1969, 7
        %v1971 = vsub.s32 %v1968, %v1970
        %v1972 = vrot.slane %v1965, %v1971
        %v1973 = vcombine.low %v1947, %v1948
        %v1975 = vunpack.c.l.s4 1983009808
        %v1976 = vunpack.c.0.s8 %v1975
        %v1977 = vlaneseq
        %v1978 = vshrl.u32 %v1977, 7
        %v1979 = vsub.s32 %v1976, %v1978
        %v1980 = vrot.slane %v1973, %v1979
        %v1981 = vcombine.low %v1956, %v1964
        %v1982 = vcombine.high %v1956, %v1964
        %v1984 = vunpack.c.l.s4 1934713408
        %v1985 = vunpack.c.0.s8 %v1984
        %v1986 = vlaneseq
        %v1987 = vshrl.u32 %v1986, 7
        %v1988 = vsub.s32 %v1985, %v1987
        %v1989 = vrot.slane %v1981, %v1988
        %v1991 = vunpack.c.l.s4 1934713408
        %v1992 = vunpack.c.0.s8 %v1991
        %v1993 = vlaneseq
        %v1994 = vshrl.u32 %v1993, 7
        %v1995 = vsub.s32 %v1992, %v1994
        %v1996 = vrot.slane %v1982, %v1995
        %v1997 = vcombine.low %v1972, %v1980
        %v1998 = vcombine.high %v1972, %v1980
        %v2000 = vunpack.c.l.s4 1934713408
        %v2001 = vunpack.c.0.s8 %v2000
        %v2002 = vlaneseq
        %v2003 = vshrl.u32 %v2002, 7
        %v2004 = vsub.s32 %v2001, %v2003
        %v2005 = vrot.slane %v1997, %v2004
        %v2007 = vunpack.c.l.s4 1934713408
        %v2008 = vunpack.c.0.s8 %v2007
        %v2009 = vlaneseq
        %v2010 = vshrl.u32 %v2009, 7
        %v2011 = vsub.s32 %v2008, %v2010
        %v2012 = vrot.slane %v1998, %v2011
        %v2013 = vcombine.low %v1989, %v2005
        %v2014 = vcombine.high %v1989, %v2005
        %v2015 = vcombine.low %v1996, %v2012
        %v2016 = vcombine.high %v1996, %v2012
        %2018 = vrot.lane.b32.xlu0 %v2014, 8
        %v2019 = vpop.permute.xlu0 %2018
        %2022 = vrot.lane.b32.xlu0 %v2015, 16
        %v2023 = vpop.permute.xlu0 %2022
        %2026 = vrot.lane.b32.xlu0 %v2016, 24
        %v2027 = vpop.permute.xlu0 %2026
        %v2029 = vsel %vm1240, %v2013, %v2019
        %vm2030 = vcmask 130048
        %v2031 = vsel %vm2030, %v2029, %v2023
        %vm2032 = vcmask 195584
        %v2033 = vsel %vm2032, %v2031, %v2027
        %v2034 = vld [vmem:[%s9] sm:$0xff]
        %v2035 = vld [vmem:[%s9 + $0x8] sm:$0xff]
        %v2036 = vld [vmem:[%s9 + $0x10] sm:$0xff]
        %v2037 = vld [vmem:[%s9 + $0x18] sm:$0xff]
        %v2038 = vld [vmem:[%s10] sm:$0x1]
        %v2040 = vlaneseq
        %v2041 = vshrl.u32 %v2040, 7
        %v2042 = vsub.s32 0, %v2041
        %v2043 = vrot.slane %v2038, %v2042
        %v2046 = vsel %vm560, %v2033, 0
        %2048 = vmatprep.subr.mxu0 0.0
        %2049 = vmatpush1.msra.mxu0 %v2034
        %2050 = vmatprep.subr.mxu0 0.0
        %2051 = vmatpush1.msra.mxu0 %v2035
        %2052 = vmatprep.subr.mxu0 0.0
        %2053 = vmatpush1.msra.mxu0 %v2036
        %2054 = vmatprep.subr.mxu0 0.0
        %2055 = vmatpush1.msra.mxu0 %v2037
        %2056 = vmatprep.subr.mxu0 0.0
        %2057 = vmatpush1.msra.mxu0 0.0
        %2058 = vmatprep.subr.mxu0 0.0
        %2059 = vmatpush1.msra.mxu0 0.0
        %2060 = vmatprep.subr.mxu0 0.0
        %2061 = vmatpush1.msra.mxu0 0.0
        %2062 = vmatprep.subr.mxu0 0.0
        %2063 = vmatpush1.msra.mxu0 0.0
        %2064 = vmatprep.subr.mxu0 0.0
        %2065 = vmatpush1.msra.mxu0 0.0
        %2066 = vmatprep.subr.mxu0 0.0
        %2067 = vmatpush1.msra.mxu0 0.0
        %2068 = vmatprep.subr.mxu0 0.0
        %2069 = vmatpush1.msra.mxu0 0.0
        %2070 = vmatprep.subr.mxu0 0.0
        %2071 = vmatpush1.msra.mxu0 0.0
        %2072 = vmatprep.subr.mxu0 0.0
        %2073 = vmatpush1.msra.mxu0 0.0
        %2074 = vmatprep.subr.mxu0 0.0
        %2075 = vmatpush1.msra.mxu0 0.0
        %2076 = vmatprep.subr.mxu0 0.0
        %2077 = vmatpush1.msra.mxu0 0.0
        %2078 = vmatprep.subr.mxu0 0.0
        %2079 = vmatpush1.msra.mxu0 0.0
        %2080 = vmatprep.subr.mxu0 0.0
        %2081 = vmatpush1.msra.mxu0 0.0
        %2082 = vmatprep.subr.mxu0 0.0
        %2083 = vmatpush1.msra.mxu0 0.0
        %2084 = vmatprep.subr.mxu0 0.0
        %2085 = vmatpush1.msra.mxu0 0.0
        %2086 = vmatprep.subr.mxu0 0.0
        %2087 = vmatpush1.msra.mxu0 0.0
        %2088 = vmatprep.subr.mxu0 0.0
        %2089 = vmatpush1.msra.mxu0 0.0
        %2090 = vmatprep.subr.mxu0 0.0
        %2091 = vmatpush1.msra.mxu0 0.0
        %2092 = vmatprep.subr.mxu0 0.0
        %2093 = vmatpush1.msra.mxu0 0.0
        %2094 = vmatprep.subr.mxu0 0.0
        %2095 = vmatpush1.msra.mxu0 0.0
        %2096 = vmatprep.subr.mxu0 0.0
        %2097 = vmatpush1.msra.mxu0 0.0
        %2098 = vmatprep.subr.mxu0 0.0
        %2099 = vmatpush1.msra.mxu0 0.0
        %2100 = vmatprep.subr.mxu0 0.0
        %2101 = vmatpush1.msra.mxu0 0.0
        %2102 = vmatprep.subr.mxu0 0.0
        %2103 = vmatpush1.msra.mxu0 0.0
        %2104 = vmatprep.subr.mxu0 0.0
        %2105 = vmatpush1.msra.mxu0 0.0
        %2106 = vmatprep.subr.mxu0 0.0
        %2107 = vmatpush1.msra.mxu0 0.0
        %2108 = vmatprep.subr.mxu0 0.0
        %2109 = vmatpush1.msra.mxu0 0.0
        %2110 = vmatprep.subr.mxu0 0.0
        %2111 = vmatpush1.msra.mxu0 0.0
        %2112 = vmatprep.mubr.f32.mxu0 0.0
        %2113 = vmatmul.mubr.f32.gmra.mrb[0].mxu0 %v2046
        %v2114 = vpop.f32.mrb[0].mxu0
        %v2115 = vadd.f32 %v2043, %v2114
        %v2116 = vpop.f32.mrb[0].mxu0
        %2117 = vdwg.mxu0
        %2118 = vst.msk [vmem:[%s545] sm:$0xff] %vm560, %v2115
        %s2119 = sand.u32 %s303, 1
        %s2120 = scalar_lea.sflag [#allocation4], %s2119
        %s2121 = sand.u32 %s303, 1
        %s2122 = smul.addr %s2121, 8
        %s2123 = scalar_lea.vmem [#allocation14], %s2122
        // Predicated region
        $region93: #{tpu_custom_call.1} parent=63 // pred_check
          %p2124 = pneg %p313
        $region94: #{tpu_custom_call.1} parent=63 // pred_check_branch
          %2126 = sbr.rel (%p2124) target = $region96
        $region95: #{tpu_custom_call.1} parent=63 // pred_region
          %s2128 = ssub.s32 128, 128
          %2129 = vsyncadd %s2120, %s2128
          %s2130 = sadd.s32 %s38, %s37
          %s2131 = smul.addr %s2130, 128
          %s2132 = scalar_lea.hbm %s11, %s2131
          %s2134 = sshll.u32 %s2123, 4
          %s2135 = int_to_ptr.vmem [resolvable:$true] %s2134
          %2137 = dma.vmem_to_hbm [thread:$0]  %s2135, 128, %s2132, %s2120
        $region96: #{tpu_custom_call.1} parent=63 // pred_fallthru
          _
      $region64: #{tpu_custom_call.1} parent=5 // pred_fallthru
        _
      %p2138 = scmp.le.s32.totalorder 2, %s28
      // Predicated region
      $region97: #{tpu_custom_call.1} parent=5 // pred_check
        %p2139 = pneg %p2138
      $region98: #{tpu_custom_call.1} parent=5 // pred_check_branch
        %2141 = sbr.rel (%p2139) target = $region100
      $region99: #{tpu_custom_call.1} parent=5 // pred_region
        %s2142 = ssub.s32 %s28, 2
        // Predicated region
        $region101: #{tpu_custom_call.1} parent=99 // pred_check
          %p2143 = pneg %p319
        $region102: #{tpu_custom_call.1} parent=99 // pred_check_branch
          %2145 = sbr.rel (%p2143) target = $region104
        $region103: #{tpu_custom_call.1} parent=99 // pred_region
          %s2146 = sand.u32 %s304, 1
          %s2147 = scalar_lea.sflag [#allocation4], %s2146
          %s2148 = sand.u32 %s304, 1
          %s2149 = smul.addr %s2148, 8
          %s2150 = scalar_lea.vmem [#allocation14], %s2149
          %2151 = dma.done %s2147, 128
        $region104: #{tpu_custom_call.1} parent=99 // pred_fallthru
          _
      $region100: #{tpu_custom_call.1} parent=5 // pred_fallthru
        _
    $region6: #{tpu_custom_call.1} parent=1 // loop_footer
      %s32 = sadd.s32 1, %s28
    $region7: #{tpu_custom_call.1} parent=1 // loop_footer_branch
      %27 = sbr.rel target = $region3
    $region8: #{tpu_custom_call.1} parent=1 // loop_exit
      _
    %2152 = vsyncpa [#allocation3], 1
    %s2153 = scalar_lea.sflag [#allocation3], 1
    %2154 = vsyncpa %s2153, 1
    %2155 = vsyncpa [#allocation6], 1
    %s2156 = scalar_lea.sflag [#allocation6], 1
    %2157 = vsyncpa %s2156, 1
    %2158 = vsyncpa [#allocation9], 1
    %2159 = vsyncpa [#allocation12], 1
    %2160 = vsyncpa [#allocation4], 1
    %s2161 = scalar_lea.sflag [#allocation4], 1
    %2162 = vsyncpa %s2161, 1

</llo_original>
